<compile_context>
chip_gen: v6e
topology: v6e:2x2x1
jax: 0.10.0
libtpu: 0.0.40
codegen_flags: <defaults>
</compile_context>

<pallas_src>
import jax
import jax.numpy as jnp
from jax.experimental import pallas as pl
from jax.experimental.pallas import tpu as pltpu


# ---------------------------------------------------------------------------
# Kernel builder (all config is static / baked into the traced body)
# ---------------------------------------------------------------------------
def _make_tcn_kernel(TB, L, C, K, dilations, has_down):
    """Kernel for a fixed TCN config.

    Weight refs (one per conv, 2 per level):
        level i conv1: [C, K*C] bf16, or [C, (K+1)*C] if the level has a 1x1
                       downsample (its weight occupies the last C lanes)
        level i conv2: [C, K*C] bf16
    Shift stack: per level [conv1 shift, conv2 shift, (downsample bias)], each
        a [C] f32 row of s_ref.
    """
    n_levels = len(dilations)
    n_w = 2 * n_levels

    def kernel(x_ref, *rest):
        w_refs = rest[:n_w]
        s_ref = rest[n_w]
        out_ref = rest[n_w + 1]

        shifts = s_ref[...]                                  # [NS, C] f32
        h = x_ref[...].reshape(TB * L, C)                    # f32 activations

        # Local time index of each fused row (row = b_local*L + t), no modulo.
        t_idx = jax.lax.broadcasted_iota(
            jnp.int32, (TB, L, C), 1).reshape(TB * L, C)
        # One causal mask per distinct live shift, shared across convs/levels.
        live_shifts = sorted({(K - 1 - j) * d
                              for d in dilations for j in range(K - 1)
                              if (K - 1 - j) * d < L})
        masks = {s: t_idx >= s for s in live_shifts}

        def causal_conv(h16, w_ref, shift_row, dilation, has_extra):
            # Single wide MXU pass: [M, C] x [C, K*C (+C)], f32 accumulation.
            y = jnp.dot(h16, w_ref[...], preferred_element_type=jnp.float32)
            # Tap K-1 has zero time shift -> initializes the accumulator.
            acc = y[:, (K - 1) * C:K * C]
            for j in range(K - 1):
                s = (K - 1 - j) * dilation
                if s >= L:                                   # statically dead
                    continue
                tap = pltpu.roll(y[:, j * C:(j + 1) * C], shift=s, axis=0)
                acc = acc + jnp.where(masks[s], tap, 0.0)
            acc = acc + shift_row                            # folded BN + bias
            extra = y[:, K * C:(K + 1) * C] if has_extra else None
            return acc, extra

        si = 0
        for lvl, d in enumerate(dilations):
            h16 = h.astype(jnp.bfloat16)
            o, down = causal_conv(h16, w_refs[2 * lvl],
                                  shifts[si:si + 1], d, has_down[lvl])
            o = jnp.maximum(o, 0.0)                          # bn1 + relu
            o2, _ = causal_conv(o.astype(jnp.bfloat16), w_refs[2 * lvl + 1],
                                shifts[si + 1:si + 2], d, False)
            o2 = jnp.maximum(o2, 0.0)                        # bn2 + relu
            si += 2
            if has_down[lvl]:                                # 1x1 downsample
                res = down + shifts[si:si + 1]
                si += 1
            else:
                res = h
            h = jnp.maximum(o2 + res, 0.0)                   # residual + relu

        # out[:, :, -1]: copy the last time-step row of each batch directly
        # (no stride-L sublane gather of the whole tile).
        for b in range(TB):
            row = (b + 1) * L - 1
            out_ref[0, b:b + 1, :] = h[row:row + 1, :]

    return kernel


# ---------------------------------------------------------------------------
# Host wrapper
# ---------------------------------------------------------------------------
def temporal_conv_net(x, w_list, sstack, *, num_inputs, num_channels,
                      kernel_size, batch_tile=None):
    """x: [B, L, num_inputs] (same tensor the PyTorch forward receives)."""
    B, L, cin = x.shape
    assert cin == num_inputs
    C = num_channels[-1]
    assert all(c == C for c in num_channels), "uniform channel width expected"
    assert num_inputs <= C and C % 128 == 0
    n_levels = len(num_channels)
    dilations = tuple(2 ** i for i in range(n_levels))
    has_down = tuple(
        (num_inputs if i == 0 else num_channels[i - 1]) != num_channels[i]
        for i in range(n_levels))

    # Batch tile: aim for >= 256 matmul rows per grid step (amortize MXU
    # fill/drain) while keeping live f32 intermediates a few MiB.
    if batch_tile is None:
        batch_tile = min(B, max(1, -(-256 // L)))
    TB = int(batch_tile)
    n_tiles = -(-B // TB)
    B_pad = n_tiles * TB

    # Lane-dense input: pad channels to C (weights padded to match) and pad
    # the batch to a multiple of the batch tile.
    x_pad = jnp.pad(x.astype(jnp.float32),
                    ((0, B_pad - B), (0, 0), (0, C - cin)))

    kernel = _make_tcn_kernel(TB, L, C, kernel_size, dilations, has_down)

    w_specs = [pl.BlockSpec(w.shape, lambda b: (0, 0)) for w in w_list]
    out = pl.pallas_call(
        kernel,
        out_shape=jax.ShapeDtypeStruct((n_tiles, TB, C), jnp.float32),
        grid=(n_tiles,),
        in_specs=([pl.BlockSpec((TB, L, C), lambda b: (b, 0, 0))]
                  + w_specs
                  + [pl.BlockSpec(sstack.shape, lambda b: (0, 0))]),
        out_specs=pl.BlockSpec((1, TB, C), lambda b: (b, 0, 0)),
        compiler_params=pltpu.CompilerParams(
            dimension_semantics=("parallel",),
            vmem_limit_bytes=32 * 1024 * 1024),
    )(x_pad, *w_list, sstack)
    return out.reshape(B_pad, C)[:B]


# ---------------------------------------------------------------------------
# Parameter prep: PyTorch-shaped raw params -> folded, packed kernel params
# ---------------------------------------------------------------------------
def pack_params(raw, num_inputs, num_channels, kernel_size, eps=1e-5):
    """Fold BN (eval) + conv bias into weights/shifts and pack each conv's K
    taps (plus the level's 1x1 downsample, if any) into one wide bf16 RHS."""
    C = num_channels[-1]
    K = kernel_size

    def fold_conv(w, b, gamma, beta, mean, var):
        scale = gamma / jnp.sqrt(var + eps)                  # [out]
        return w * scale[:, None, None], beta + scale * (b - mean)

    def pad_mat(m):                                          # [in, out] -> [C, C]
        return jnp.pad(m, ((0, C - m.shape[0]), (0, C - m.shape[1])))

    def pad_vec(v):
        return jnp.pad(v, (0, C - v.shape[0]))

    w_list, s_slabs = [], []
    for p in raw:
        w1, s1 = fold_conv(p["c1w"], p["c1b"], p["g1"], p["b1"], p["m1"], p["v1"])
        w2, s2 = fold_conv(p["c2w"], p["c2b"], p["g2"], p["b2"], p["m2"], p["v2"])
        taps1 = [pad_mat(w1[:, :, j].T) for j in range(K)]
        if "dw" in p:                                        # fuse 1x1 downsample
            taps1.append(pad_mat(p["dw"][:, :, 0].T))
        w_list.append(jnp.concatenate(taps1, axis=1).astype(jnp.bfloat16))
        taps2 = [pad_mat(w2[:, :, j].T) for j in range(K)]
        w_list.append(jnp.concatenate(taps2, axis=1).astype(jnp.bfloat16))
        s_slabs += [pad_vec(s1), pad_vec(s2)]
        if "dw" in p:
            s_slabs.append(pad_vec(p["db"]))

    sstack = jnp.stack(s_slabs).astype(jnp.float32)          # [NS, C]
    return w_list, sstack


def init_raw_params(key, num_inputs, num_channels, kernel_size):
    """Random params with the PyTorch module's shapes (Conv1d [out,in,K]+bias,
    BatchNorm1d gamma/beta/running_mean/running_var, optional 1x1 downsample)."""
    keys = iter(jax.random.split(key, 16 * len(num_channels)))

    def nrm(shape, scale):
        return (scale * jax.random.normal(next(keys), shape)).astype(jnp.float32)

    raw = []
    for i, out_ch in enumerate(num_channels):
        in_ch = num_inputs if i == 0 else num_channels[i - 1]
        p = {
            "c1w": nrm((out_ch, in_ch, kernel_size), 0.08),
            "c1b": nrm((out_ch,), 0.02),
            "g1": 1.0 + nrm((out_ch,), 0.05), "b1": nrm((out_ch,), 0.02),
            "m1": nrm((out_ch,), 0.05),
            "v1": 1.0 + 0.2 * jax.random.uniform(next(keys), (out_ch,)),
            "c2w": nrm((out_ch, out_ch, kernel_size), 0.08),
            "c2b": nrm((out_ch,), 0.02),
            "g2": 1.0 + nrm((out_ch,), 0.05), "b2": nrm((out_ch,), 0.02),
            "m2": nrm((out_ch,), 0.05),
            "v2": 1.0 + 0.2 * jax.random.uniform(next(keys), (out_ch,)),
        }
        if in_ch != out_ch:
            p["dw"] = nrm((out_ch, in_ch, 1), 0.08)
            p["db"] = nrm((out_ch,), 0.02)
        raw.append(p)
    return raw


# ---------------------------------------------------------------------------
# Pure-JAX mirror of the PyTorch eval-mode forward (for numeric verification)
# ---------------------------------------------------------------------------
def tcn_reference(x, raw, kernel_size, eps=1e-5):
    K = kernel_size
    h = jnp.transpose(x, (0, 2, 1))                          # [B, Cin, L]

    def conv1d(z, w, b, dilation):                           # valid conv, stride 1
        k = w.shape[2]
        lout = z.shape[2] - (k - 1) * dilation
        out = jnp.zeros((z.shape[0], w.shape[0], lout), jnp.float32)
        for j in range(k):
            out = out + jnp.einsum(
                "bil,oi->bol", z[:, :, j * dilation:j * dilation + lout],
                w[:, :, j], precision=jax.lax.Precision.HIGHEST)
        return out + b[None, :, None]

    def bn_eval(z, gamma, beta, mean, var):
        inv = gamma / jnp.sqrt(var + eps)
        return z * inv[None, :, None] + (beta - mean * inv)[None, :, None]

    for i, p in enumerate(raw):
        d = 2 ** i
        pad = (K - 1) * d
        o = jnp.pad(h, ((0, 0), (0, 0), (pad, 0)))
        o = jax.nn.relu(bn_eval(conv1d(o, p["c1w"], p["c1b"], d),
                                p["g1"], p["b1"], p["m1"], p["v1"]))
        o = jnp.pad(o, ((0, 0), (0, 0), (pad, 0)))
        o = jax.nn.relu(bn_eval(conv1d(o, p["c2w"], p["c2b"], d),
                                p["g2"], p["b2"], p["m2"], p["v2"]))
        res = h if "dw" not in p else conv1d(h, p["dw"], p["db"], 1)
        h = jax.nn.relu(o + res)
    return h[:, :, -1]


# ---------------------------------------------------------------------------
if __name__ == "__main__":
    B = 8
    L = 16                       # temporal length seen by Conv1d (x.shape[1])
    num_inputs = 32              # Conv1d input channels      (x.shape[2])
    num_channels = (128, 128)    # two TemporalBlocks, dilations 1 and 2
    kernel_size = 3

    key = jax.random.PRNGKey(0)
    k_x, k_p = jax.random.split(key)
    x = jax.random.normal(k_x, (B, L, num_inputs), dtype=jnp.float32)

    raw = init_raw_params(k_p, num_inputs, num_channels, kernel_size)
    w_list, sstack = pack_params(raw, num_inputs, num_channels, kernel_size)

    # batch_tile=4 -> grid=(2,) so the batch-parallel pipeline path is exercised.
    out = temporal_conv_net(x, w_list, sstack, num_inputs=num_inputs,
                            num_channels=num_channels,
                            kernel_size=kernel_size, batch_tile=4)
    out = jax.block_until_ready(out)

    assert out.shape == (B, num_channels[-1]), out.shape
    assert out.dtype == jnp.float32, out.dtype
    assert bool(jnp.all(jnp.isfinite(out)))

    # Numeric cross-check against the PyTorch-equivalent eval-mode forward.
    ref = jax.block_until_ready(tcn_reference(x, raw, kernel_size))
    rel_err = float(jnp.linalg.norm(out - ref) / (jnp.linalg.norm(ref) + 1e-6))
    assert rel_err < 5e-2, f"relative error vs reference = {rel_err}"

    print("KERNEL_OK")
</pallas_src>

<mosaic_0001>
module attributes {stable_mosaic.version = 11 : i64} {
  func.func @kernel(%arg0: i32, %arg1: memref<4x16x128xf32, #tpu.memory_space<vmem>>, %arg2: memref<128x512xbf16, #tpu.memory_space<vmem>>, %arg3: memref<128x384xbf16, #tpu.memory_space<vmem>>, %arg4: memref<128x384xbf16, #tpu.memory_space<vmem>>, %arg5: memref<128x384xbf16, #tpu.memory_space<vmem>>, %arg6: memref<5x128xf32, #tpu.memory_space<vmem>>, %arg7: memref<1x4x128xf32, #tpu.memory_space<vmem>>) attributes {dimension_semantics = [#tpu.dimension_semantics<parallel>], iteration_bounds = array<i64: 2>, scalar_prefetch = 0 : i64, scratch_operands = 0 : i64, tpu.core_type = #tpu.core_type<tc>, window_params = [{transform_indices = @transform_0, window_bounds = array<i64: 4, 16, 128>}, {pipeline_mode = #tpu.pipeline_mode<synchronous>, transform_indices = @transform_1, window_bounds = array<i64: 128, 512>}, {pipeline_mode = #tpu.pipeline_mode<synchronous>, transform_indices = @transform_2, window_bounds = array<i64: 128, 384>}, {pipeline_mode = #tpu.pipeline_mode<synchronous>, transform_indices = @transform_3, window_bounds = array<i64: 128, 384>}, {pipeline_mode = #tpu.pipeline_mode<synchronous>, transform_indices = @transform_4, window_bounds = array<i64: 128, 384>}, {pipeline_mode = #tpu.pipeline_mode<synchronous>, transform_indices = @transform_5, window_bounds = array<i64: 5, 128>}, {transform_indices = @transform_6, window_bounds = array<i64: 1, 4, 128>}]} {
    %c0 = arith.constant 0 : index
    %c0_0 = arith.constant 0 : index
    %0 = vector.load %arg6[%c0, %c0_0] : memref<5x128xf32, #tpu.memory_space<vmem>>, vector<5x128xf32>
    %c0_1 = arith.constant 0 : index
    %c0_2 = arith.constant 0 : index
    %c0_3 = arith.constant 0 : index
    %1 = vector.load %arg1[%c0_1, %c0_2, %c0_3] : memref<4x16x128xf32, #tpu.memory_space<vmem>>, vector<4x16x128xf32>
    %2 = vector.shape_cast %1 : vector<4x16x128xf32> to vector<64x128xf32>
    %3 = tpu.iota {dimensions = array<i32: 1>} : vector<4x16x128xi32>
    %4 = vector.shape_cast %3 : vector<4x16x128xi32> to vector<64x128xi32>
    %c1_i32 = arith.constant 1 : i32
    %5 = vector.broadcast %c1_i32 : i32 to vector<64x128xi32>
    %6 = arith.cmpi sge, %4, %5 : vector<64x128xi32>
    %c2_i32 = arith.constant 2 : i32
    %7 = vector.broadcast %c2_i32 : i32 to vector<64x128xi32>
    %8 = arith.cmpi sge, %4, %7 : vector<64x128xi32>
    %c4_i32 = arith.constant 4 : i32
    %9 = vector.broadcast %c4_i32 : i32 to vector<64x128xi32>
    %10 = arith.cmpi sge, %4, %9 : vector<64x128xi32>
    %11 = arith.truncf %2 : vector<64x128xf32> to vector<64x128xbf16>
    %12 = vector.extract_strided_slice %0 {offsets = [0, 0], sizes = [1, 128], strides = [1, 1]} : vector<5x128xf32> to vector<1x128xf32>
    %c0_4 = arith.constant 0 : index
    %c0_5 = arith.constant 0 : index
    %13 = vector.load %arg2[%c0_4, %c0_5] : memref<128x512xbf16, #tpu.memory_space<vmem>>, vector<128x512xbf16>
    %cst = arith.constant dense<0.000000e+00> : vector<64x512xf32>
    %14 = tpu.matmul %11, %13, %cst {dimension_numbers = #tpu.dot_dimension_numbers<[1], [0], [0], [1], [0, 0, 1, 1], [], []>} : vector<64x128xbf16>, vector<128x512xbf16>, vector<64x512xf32> -> vector<64x512xf32>
    %15 = vector.extract_strided_slice %14 {offsets = [0, 256], sizes = [64, 128], strides = [1, 1]} : vector<64x512xf32> to vector<64x128xf32>
    %16 = vector.extract_strided_slice %14 {offsets = [0, 0], sizes = [64, 128], strides = [1, 1]} : vector<64x512xf32> to vector<64x128xf32>
    %c2_i32_6 = arith.constant 2 : i32
    %17 = tpu.dynamic_rotate %16 by %c2_i32_6 dim 0 : vector<64x128xf32>, i32 -> vector<64x128xf32>
    %cst_7 = arith.constant 0.000000e+00 : f32
    %18 = vector.broadcast %cst_7 : f32 to vector<64x128xf32>
    %19 = arith.select %8, %17, %18 : vector<64x128xi1>, vector<64x128xf32>
    %20 = arith.addf %15, %19 : vector<64x128xf32>
    %21 = vector.extract_strided_slice %14 {offsets = [0, 128], sizes = [64, 128], strides = [1, 1]} : vector<64x512xf32> to vector<64x128xf32>
    %c1_i32_8 = arith.constant 1 : i32
    %22 = tpu.dynamic_rotate %21 by %c1_i32_8 dim 0 : vector<64x128xf32>, i32 -> vector<64x128xf32>
    %cst_9 = arith.constant 0.000000e+00 : f32
    %23 = vector.broadcast %cst_9 : f32 to vector<64x128xf32>
    %24 = arith.select %6, %22, %23 : vector<64x128xi1>, vector<64x128xf32>
    %25 = arith.addf %20, %24 : vector<64x128xf32>
    %26 = vector.broadcast %12 : vector<1x128xf32> to vector<64x128xf32>
    %27 = arith.addf %25, %26 : vector<64x128xf32>
    %28 = vector.extract_strided_slice %14 {offsets = [0, 384], sizes = [64, 128], strides = [1, 1]} : vector<64x512xf32> to vector<64x128xf32>
    %cst_10 = arith.constant 0.000000e+00 : f32
    %29 = vector.broadcast %cst_10 : f32 to vector<64x128xf32>
    %30 = arith.maximumf %27, %29 : vector<64x128xf32>
    %31 = arith.truncf %30 : vector<64x128xf32> to vector<64x128xbf16>
    %32 = vector.extract_strided_slice %0 {offsets = [1, 0], sizes = [1, 128], strides = [1, 1]} : vector<5x128xf32> to vector<1x128xf32>
    %c0_11 = arith.constant 0 : index
    %c0_12 = arith.constant 0 : index
    %33 = vector.load %arg3[%c0_11, %c0_12] : memref<128x384xbf16, #tpu.memory_space<vmem>>, vector<128x384xbf16>
    %cst_13 = arith.constant dense<0.000000e+00> : vector<64x384xf32>
    %34 = tpu.matmul %31, %33, %cst_13 {dimension_numbers = #tpu.dot_dimension_numbers<[1], [0], [0], [1], [0, 0, 1, 1], [], []>} : vector<64x128xbf16>, vector<128x384xbf16>, vector<64x384xf32> -> vector<64x384xf32>
    %35 = vector.extract_strided_slice %34 {offsets = [0, 256], sizes = [64, 128], strides = [1, 1]} : vector<64x384xf32> to vector<64x128xf32>
    %36 = vector.extract_strided_slice %34 {offsets = [0, 0], sizes = [64, 128], strides = [1, 1]} : vector<64x384xf32> to vector<64x128xf32>
    %c2_i32_14 = arith.constant 2 : i32
    %37 = tpu.dynamic_rotate %36 by %c2_i32_14 dim 0 : vector<64x128xf32>, i32 -> vector<64x128xf32>
    %cst_15 = arith.constant 0.000000e+00 : f32
    %38 = vector.broadcast %cst_15 : f32 to vector<64x128xf32>
    %39 = arith.select %8, %37, %38 : vector<64x128xi1>, vector<64x128xf32>
    %40 = arith.addf %35, %39 : vector<64x128xf32>
    %41 = vector.extract_strided_slice %34 {offsets = [0, 128], sizes = [64, 128], strides = [1, 1]} : vector<64x384xf32> to vector<64x128xf32>
    %c1_i32_16 = arith.constant 1 : i32
    %42 = tpu.dynamic_rotate %41 by %c1_i32_16 dim 0 : vector<64x128xf32>, i32 -> vector<64x128xf32>
    %cst_17 = arith.constant 0.000000e+00 : f32
    %43 = vector.broadcast %cst_17 : f32 to vector<64x128xf32>
    %44 = arith.select %6, %42, %43 : vector<64x128xi1>, vector<64x128xf32>
    %45 = arith.addf %40, %44 : vector<64x128xf32>
    %46 = vector.broadcast %32 : vector<1x128xf32> to vector<64x128xf32>
    %47 = arith.addf %45, %46 : vector<64x128xf32>
    %cst_18 = arith.constant 0.000000e+00 : f32
    %48 = vector.broadcast %cst_18 : f32 to vector<64x128xf32>
    %49 = arith.maximumf %47, %48 : vector<64x128xf32>
    %50 = vector.extract_strided_slice %0 {offsets = [2, 0], sizes = [1, 128], strides = [1, 1]} : vector<5x128xf32> to vector<1x128xf32>
    %51 = vector.broadcast %50 : vector<1x128xf32> to vector<64x128xf32>
    %52 = arith.addf %28, %51 : vector<64x128xf32>
    %53 = arith.addf %49, %52 : vector<64x128xf32>
    %cst_19 = arith.constant 0.000000e+00 : f32
    %54 = vector.broadcast %cst_19 : f32 to vector<64x128xf32>
    %55 = arith.maximumf %53, %54 : vector<64x128xf32>
    %56 = arith.truncf %55 : vector<64x128xf32> to vector<64x128xbf16>
    %57 = vector.extract_strided_slice %0 {offsets = [3, 0], sizes = [1, 128], strides = [1, 1]} : vector<5x128xf32> to vector<1x128xf32>
    %c0_20 = arith.constant 0 : index
    %c0_21 = arith.constant 0 : index
    %58 = vector.load %arg4[%c0_20, %c0_21] : memref<128x384xbf16, #tpu.memory_space<vmem>>, vector<128x384xbf16>
    %cst_22 = arith.constant dense<0.000000e+00> : vector<64x384xf32>
    %59 = tpu.matmul %56, %58, %cst_22 {dimension_numbers = #tpu.dot_dimension_numbers<[1], [0], [0], [1], [0, 0, 1, 1], [], []>} : vector<64x128xbf16>, vector<128x384xbf16>, vector<64x384xf32> -> vector<64x384xf32>
    %60 = vector.extract_strided_slice %59 {offsets = [0, 256], sizes = [64, 128], strides = [1, 1]} : vector<64x384xf32> to vector<64x128xf32>
    %61 = vector.extract_strided_slice %59 {offsets = [0, 0], sizes = [64, 128], strides = [1, 1]} : vector<64x384xf32> to vector<64x128xf32>
    %c4_i32_23 = arith.constant 4 : i32
    %62 = tpu.dynamic_rotate %61 by %c4_i32_23 dim 0 : vector<64x128xf32>, i32 -> vector<64x128xf32>
    %cst_24 = arith.constant 0.000000e+00 : f32
    %63 = vector.broadcast %cst_24 : f32 to vector<64x128xf32>
    %64 = arith.select %10, %62, %63 : vector<64x128xi1>, vector<64x128xf32>
    %65 = arith.addf %60, %64 : vector<64x128xf32>
    %66 = vector.extract_strided_slice %59 {offsets = [0, 128], sizes = [64, 128], strides = [1, 1]} : vector<64x384xf32> to vector<64x128xf32>
    %c2_i32_25 = arith.constant 2 : i32
    %67 = tpu.dynamic_rotate %66 by %c2_i32_25 dim 0 : vector<64x128xf32>, i32 -> vector<64x128xf32>
    %cst_26 = arith.constant 0.000000e+00 : f32
    %68 = vector.broadcast %cst_26 : f32 to vector<64x128xf32>
    %69 = arith.select %8, %67, %68 : vector<64x128xi1>, vector<64x128xf32>
    %70 = arith.addf %65, %69 : vector<64x128xf32>
    %71 = vector.broadcast %57 : vector<1x128xf32> to vector<64x128xf32>
    %72 = arith.addf %70, %71 : vector<64x128xf32>
    %cst_27 = arith.constant 0.000000e+00 : f32
    %73 = vector.broadcast %cst_27 : f32 to vector<64x128xf32>
    %74 = arith.maximumf %72, %73 : vector<64x128xf32>
    %75 = arith.truncf %74 : vector<64x128xf32> to vector<64x128xbf16>
    %76 = vector.extract_strided_slice %0 {offsets = [4, 0], sizes = [1, 128], strides = [1, 1]} : vector<5x128xf32> to vector<1x128xf32>
    %c0_28 = arith.constant 0 : index
    %c0_29 = arith.constant 0 : index
    %77 = vector.load %arg5[%c0_28, %c0_29] : memref<128x384xbf16, #tpu.memory_space<vmem>>, vector<128x384xbf16>
    %cst_30 = arith.constant dense<0.000000e+00> : vector<64x384xf32>
    %78 = tpu.matmul %75, %77, %cst_30 {dimension_numbers = #tpu.dot_dimension_numbers<[1], [0], [0], [1], [0, 0, 1, 1], [], []>} : vector<64x128xbf16>, vector<128x384xbf16>, vector<64x384xf32> -> vector<64x384xf32>
    %79 = vector.extract_strided_slice %78 {offsets = [0, 256], sizes = [64, 128], strides = [1, 1]} : vector<64x384xf32> to vector<64x128xf32>
    %80 = vector.extract_strided_slice %78 {offsets = [0, 0], sizes = [64, 128], strides = [1, 1]} : vector<64x384xf32> to vector<64x128xf32>
    %c4_i32_31 = arith.constant 4 : i32
    %81 = tpu.dynamic_rotate %80 by %c4_i32_31 dim 0 : vector<64x128xf32>, i32 -> vector<64x128xf32>
    %cst_32 = arith.constant 0.000000e+00 : f32
    %82 = vector.broadcast %cst_32 : f32 to vector<64x128xf32>
    %83 = arith.select %10, %81, %82 : vector<64x128xi1>, vector<64x128xf32>
    %84 = arith.addf %79, %83 : vector<64x128xf32>
    %85 = vector.extract_strided_slice %78 {offsets = [0, 128], sizes = [64, 128], strides = [1, 1]} : vector<64x384xf32> to vector<64x128xf32>
    %c2_i32_33 = arith.constant 2 : i32
    %86 = tpu.dynamic_rotate %85 by %c2_i32_33 dim 0 : vector<64x128xf32>, i32 -> vector<64x128xf32>
    %cst_34 = arith.constant 0.000000e+00 : f32
    %87 = vector.broadcast %cst_34 : f32 to vector<64x128xf32>
    %88 = arith.select %8, %86, %87 : vector<64x128xi1>, vector<64x128xf32>
    %89 = arith.addf %84, %88 : vector<64x128xf32>
    %90 = vector.broadcast %76 : vector<1x128xf32> to vector<64x128xf32>
    %91 = arith.addf %89, %90 : vector<64x128xf32>
    %cst_35 = arith.constant 0.000000e+00 : f32
    %92 = vector.broadcast %cst_35 : f32 to vector<64x128xf32>
    %93 = arith.maximumf %91, %92 : vector<64x128xf32>
    %94 = arith.addf %93, %55 : vector<64x128xf32>
    %cst_36 = arith.constant 0.000000e+00 : f32
    %95 = vector.broadcast %cst_36 : f32 to vector<64x128xf32>
    %96 = arith.maximumf %94, %95 : vector<64x128xf32>
    %97 = vector.extract_strided_slice %96 {offsets = [15, 0], sizes = [1, 128], strides = [1, 1]} : vector<64x128xf32> to vector<1x128xf32>
    %c0_37 = arith.constant 0 : index
    %c0_38 = arith.constant 0 : index
    %c0_39 = arith.constant 0 : index
    %98 = vector.load %arg7[%c0_37, %c0_38, %c0_39] : memref<1x4x128xf32, #tpu.memory_space<vmem>>, vector<1x1x128xf32>
    %99 = vector.shape_cast %98 : vector<1x1x128xf32> to vector<1x128xf32>
    %100 = vector.shape_cast %97 : vector<1x128xf32> to vector<1x1x128xf32>
    tpu.vector_store %arg7[%c0_37, %c0_38, %c0_39], %100 {strides = array<i32>} : memref<1x4x128xf32, #tpu.memory_space<vmem>>, vector<1x1x128xf32>,
    %101 = vector.extract_strided_slice %96 {offsets = [31, 0], sizes = [1, 128], strides = [1, 1]} : vector<64x128xf32> to vector<1x128xf32>
    %c0_40 = arith.constant 0 : index
    %c1 = arith.constant 1 : index
    %c0_41 = arith.constant 0 : index
    %102 = vector.load %arg7[%c0_40, %c1, %c0_41] : memref<1x4x128xf32, #tpu.memory_space<vmem>>, vector<1x1x128xf32>
    %103 = vector.shape_cast %102 : vector<1x1x128xf32> to vector<1x128xf32>
    %104 = vector.shape_cast %101 : vector<1x128xf32> to vector<1x1x128xf32>
    tpu.vector_store %arg7[%c0_40, %c1, %c0_41], %104 {strides = array<i32>} : memref<1x4x128xf32, #tpu.memory_space<vmem>>, vector<1x1x128xf32>,
    %105 = vector.extract_strided_slice %96 {offsets = [47, 0], sizes = [1, 128], strides = [1, 1]} : vector<64x128xf32> to vector<1x128xf32>
    %c0_42 = arith.constant 0 : index
    %c2 = arith.constant 2 : index
    %c0_43 = arith.constant 0 : index
    %106 = vector.load %arg7[%c0_42, %c2, %c0_43] : memref<1x4x128xf32, #tpu.memory_space<vmem>>, vector<1x1x128xf32>
    %107 = vector.shape_cast %106 : vector<1x1x128xf32> to vector<1x128xf32>
    %108 = vector.shape_cast %105 : vector<1x128xf32> to vector<1x1x128xf32>
    tpu.vector_store %arg7[%c0_42, %c2, %c0_43], %108 {strides = array<i32>} : memref<1x4x128xf32, #tpu.memory_space<vmem>>, vector<1x1x128xf32>,
    %109 = vector.extract_strided_slice %96 {offsets = [63, 0], sizes = [1, 128], strides = [1, 1]} : vector<64x128xf32> to vector<1x128xf32>
    %c0_44 = arith.constant 0 : index
    %c3 = arith.constant 3 : index
    %c0_45 = arith.constant 0 : index
    %110 = vector.load %arg7[%c0_44, %c3, %c0_45] : memref<1x4x128xf32, #tpu.memory_space<vmem>>, vector<1x1x128xf32>
    %111 = vector.shape_cast %110 : vector<1x1x128xf32> to vector<1x128xf32>
    %112 = vector.shape_cast %109 : vector<1x128xf32> to vector<1x1x128xf32>
    tpu.vector_store %arg7[%c0_44, %c3, %c0_45], %112 {strides = array<i32>} : memref<1x4x128xf32, #tpu.memory_space<vmem>>, vector<1x1x128xf32>,
    return
  }
  func.func @transform_0(%arg0: i32) -> (i32, i32, i32) {
    %c0_i32 = arith.constant 0 : i32
    %c0_i32_0 = arith.constant 0 : i32
    %c0_i32_1 = arith.constant 0 : i32
    return %arg0, %c0_i32, %c0_i32_0 : i32, i32, i32
  }
  func.func @transform_1(%arg0: i32) -> (i32, i32) {
    %c0_i32 = arith.constant 0 : i32
    %c0_i32_0 = arith.constant 0 : i32
    %c0_i32_1 = arith.constant 0 : i32
    return %c0_i32, %c0_i32_0 : i32, i32
  }
  func.func @transform_2(%arg0: i32) -> (i32, i32) {
    %c0_i32 = arith.constant 0 : i32
    %c0_i32_0 = arith.constant 0 : i32
    %c0_i32_1 = arith.constant 0 : i32
    return %c0_i32, %c0_i32_0 : i32, i32
  }
  func.func @transform_3(%arg0: i32) -> (i32, i32) {
    %c0_i32 = arith.constant 0 : i32
    %c0_i32_0 = arith.constant 0 : i32
    %c0_i32_1 = arith.constant 0 : i32
    return %c0_i32, %c0_i32_0 : i32, i32
  }
  func.func @transform_4(%arg0: i32) -> (i32, i32) {
    %c0_i32 = arith.constant 0 : i32
    %c0_i32_0 = arith.constant 0 : i32
    %c0_i32_1 = arith.constant 0 : i32
    return %c0_i32, %c0_i32_0 : i32, i32
  }
  func.func @transform_5(%arg0: i32) -> (i32, i32) {
    %c0_i32 = arith.constant 0 : i32
    %c0_i32_0 = arith.constant 0 : i32
    %c0_i32_1 = arith.constant 0 : i32
    return %c0_i32, %c0_i32_0 : i32, i32
  }
  func.func @transform_6(%arg0: i32) -> (i32, i32, i32) {
    %c0_i32 = arith.constant 0 : i32
    %c0_i32_0 = arith.constant 0 : i32
    %c0_i32_1 = arith.constant 0 : i32
    return %arg0, %c0_i32, %c0_i32_0 : i32, i32, i32
  }
}

</mosaic_0001>

<llo_original>
// kernel: tpu_custom_call.1
$region0: #{tpu_custom_call.1}
  #allocation0 [shape = 'u32[]', space=smem, size = 0x4, offset = 0x4, fixed_abs, tag = 'smem constant byte address 0x4 - core index']
  #allocation1 [shape = 'u32[144,128]{1,0:T(1,128)}', space=vmem, size = 0x12000, scoped, tag = 'internal scratch']
  %s0 = inlined_call_operand.hbm [shape: f32[8,16,128], index: 0, kind: input, shape index: {}]
  %s1 = inlined_call_operand.hbm [shape: bf16[128,512], index: 1, kind: input, shape index: {}]
  %s2 = inlined_call_operand.hbm [shape: bf16[128,384], index: 2, kind: input, shape index: {}]
  %s3 = inlined_call_operand.hbm [shape: bf16[128,384], index: 3, kind: input, shape index: {}]
  %s4 = inlined_call_operand.hbm [shape: bf16[128,384], index: 4, kind: input, shape index: {}]
  %s5 = inlined_call_operand.vmem [shape: f32[5,128], index: 5, kind: input, shape index: {}]
  %s6 = inlined_call_operand.hbm [shape: f32[2,4,128], index: 6, kind: output, shape index: {}]
  %s7 = sld [smem:[#allocation0]]
  $region77: #{tpu_custom_call.1} parent=0
    _
  %s9 = ssub.s32 1, %s7
  %s10 = scalar_select 0, %s9, %s7
  $region1: #{tpu_custom_call.1} parent=0
    #allocation2 [shape = 'u8[65536]{0}', space=vmem, size = 0x10000, scoped, tag = 'input window, operand 0']
    #allocation3 [shape = 's32[2]{0}', space=sflag, size = 0x8, scoped, tag = 'scoped memory for tpu_custom_call.1']
    #allocation4 [shape = 's32[2]{0}', space=sflag, size = 0x8, scoped, tag = 'scoped memory for tpu_custom_call.1']
    #allocation5 [shape = 'u8[131072]{0}', space=vmem, size = 0x20000, scoped, tag = 'input window, operand 1, single buffered']
    #allocation6 [shape = 's32[1]{0}', space=sflag, size = 0x4, scoped, tag = 'scoped memory for tpu_custom_call.1']
    #allocation7 [shape = 'u8[98304]{0}', space=vmem, size = 0x18000, scoped, tag = 'input window, operand 2, single buffered']
    #allocation8 [shape = 'u8[98304]{0}', space=vmem, size = 0x18000, scoped, tag = 'input window, operand 3, single buffered']
    #allocation9 [shape = 's32[1]{0}', space=sflag, size = 0x4, scoped, tag = 'scoped memory for tpu_custom_call.1']
    #allocation10 [shape = 'u8[98304]{0}', space=vmem, size = 0x18000, scoped, tag = 'input window, operand 4, single buffered']
    #allocation11 [shape = 'u8[4096]{0}', space=vmem, size = 0x1000, scoped, tag = 'output window, operand 0']
    %11 = vsyncpa [#allocation3], 0
    %s12 = scalar_lea.sflag [#allocation3], 1
    %13 = vsyncpa %s12, 0
    %14 = vsyncpa [#allocation6], 0
    %15 = vsyncpa [#allocation9], 0
    %16 = vsyncpa [#allocation4], 0
    %s17 = scalar_lea.sflag [#allocation4], 1
    %18 = vsyncpa %s17, 0
    loop: start=0, step=1, limit=4
    $region2: #{tpu_custom_call.1} parent=1 // loop_pre_header
      _
    $region3: #{tpu_custom_call.1} parent=1 // loop_header
      %s20 = sphi 0, %s24
      %p21 = scmp.ge.s32.totalorder %s20, 4
      %s30 = sphi 0, %s32
      %s33 = sphi 0, %s30
      %s34 = sphi 0, %s33
      %s50 = sphi 0, %s34
      %s54 = sphi 0, %s54
      %s56 = sphi 0, %s54
      %s57 = sphi 0, %s56
      %s71 = sphi 0, %s57
      %s75 = sphi 0, %s75
      %s77 = sphi 0, %s75
      %s78 = sphi 0, %s77
      %s92 = sphi 0, %s78
      %s96 = sphi 0, %s96
      %s98 = sphi 0, %s96
      %s99 = sphi 0, %s98
      %s113 = sphi 0, %s99
      %s117 = sphi 0, %s117
      %s119 = sphi 0, %s117
      %s120 = sphi 0, %s119
      %s134 = sphi 0, %s120
      %s138 = sphi 0, %s138
      %s140 = sphi 0, %s138
      %s141 = sphi 0, %s140
      %s155 = sphi 0, %s141
      %s161 = sphi 0, %s163
      %s164 = sphi 0, %s161
      %s165 = sphi 0, %s164
      %s181 = sphi 0, %s165
    $region4: #{tpu_custom_call.1} parent=1 // loop_header_branch
      %23 = sbr.rel (%p21) target = $region8
    $region5: #{tpu_custom_call.1} parent=1 // loop_body
      %s25 = ssub.s32 %s20, 1
      %s26 = ssub.s32 %s20, 2
      %s27 = sadd.s32 %s20, 1
      %s28 = ssub.s32 %s20, %s27
      %p29 = scmp.eq.s32.totalorder %s28, 0
      %s31 = sadd.s32 %s30, 1
      %s32 = scalar_select %p29, %s30, %s31
      %p35 = pneg %p29
      %p36 = scmp.eq.s32.totalorder %s20, 1
      %p37 = por %p35, %p36
      %p38 = scmp.ne.s32.totalorder %s30, %s33
      %p39 = scmp.eq.s32.totalorder %s20, 0
      %p40 = por %p38, %p39
      %p41 = scmp.ne.s32.totalorder %s30, %s33
      %p42 = scmp.eq.s32.totalorder %s25, 1
      %p43 = por %p41, %p42
      %p44 = scmp.ne.s32.totalorder %s33, %s34
      %p45 = scmp.eq.s32.totalorder %s25, 0
      %p46 = por %p44, %p45
      %p47 = scmp.ne.s32.totalorder %s33, %s34
      %p48 = scmp.eq.s32.totalorder %s26, 1
      %p49 = por %p47, %p48
      %p51 = scmp.ne.s32.totalorder %s34, %s50
      %p52 = scmp.eq.s32.totalorder %s26, 0
      %p53 = por %p51, %p52
      %s55 = sadd.s32 %s54, 1
      %p58 = scmp.eq.s32.totalorder %s20, 1
      %p59 = scmp.ne.s32.totalorder %s54, %s56
      %p60 = scmp.eq.s32.totalorder %s20, 0
      %p61 = por %p59, %p60
      %p62 = scmp.ne.s32.totalorder %s54, %s56
      %p63 = scmp.eq.s32.totalorder %s25, 1
      %p64 = por %p62, %p63
      %p65 = scmp.ne.s32.totalorder %s56, %s57
      %p66 = scmp.eq.s32.totalorder %s25, 0
      %p67 = por %p65, %p66
      %p68 = scmp.ne.s32.totalorder %s56, %s57
      %p69 = scmp.eq.s32.totalorder %s26, 1
      %p70 = por %p68, %p69
      %p72 = scmp.ne.s32.totalorder %s57, %s71
      %p73 = scmp.eq.s32.totalorder %s26, 0
      %p74 = por %p72, %p73
      %s76 = sadd.s32 %s75, 1
      %p79 = scmp.eq.s32.totalorder %s20, 1
      %p80 = scmp.ne.s32.totalorder %s75, %s77
      %p81 = scmp.eq.s32.totalorder %s20, 0
      %p82 = por %p80, %p81
      %p83 = scmp.ne.s32.totalorder %s75, %s77
      %p84 = scmp.eq.s32.totalorder %s25, 1
      %p85 = por %p83, %p84
      %p86 = scmp.ne.s32.totalorder %s77, %s78
      %p87 = scmp.eq.s32.totalorder %s25, 0
      %p88 = por %p86, %p87
      %p89 = scmp.ne.s32.totalorder %s77, %s78
      %p90 = scmp.eq.s32.totalorder %s26, 1
      %p91 = por %p89, %p90
      %p93 = scmp.ne.s32.totalorder %s78, %s92
      %p94 = scmp.eq.s32.totalorder %s26, 0
      %p95 = por %p93, %p94
      %s97 = sadd.s32 %s96, 1
      %p100 = scmp.eq.s32.totalorder %s20, 1
      %p101 = scmp.ne.s32.totalorder %s96, %s98
      %p102 = scmp.eq.s32.totalorder %s20, 0
      %p103 = por %p101, %p102
      %p104 = scmp.ne.s32.totalorder %s96, %s98
      %p105 = scmp.eq.s32.totalorder %s25, 1
      %p106 = por %p104, %p105
      %p107 = scmp.ne.s32.totalorder %s98, %s99
      %p108 = scmp.eq.s32.totalorder %s25, 0
      %p109 = por %p107, %p108
      %p110 = scmp.ne.s32.totalorder %s98, %s99
      %p111 = scmp.eq.s32.totalorder %s26, 1
      %p112 = por %p110, %p111
      %p114 = scmp.ne.s32.totalorder %s99, %s113
      %p115 = scmp.eq.s32.totalorder %s26, 0
      %p116 = por %p114, %p115
      %s118 = sadd.s32 %s117, 1
      %p121 = scmp.eq.s32.totalorder %s20, 1
      %p122 = scmp.ne.s32.totalorder %s117, %s119
      %p123 = scmp.eq.s32.totalorder %s20, 0
      %p124 = por %p122, %p123
      %p125 = scmp.ne.s32.totalorder %s117, %s119
      %p126 = scmp.eq.s32.totalorder %s25, 1
      %p127 = por %p125, %p126
      %p128 = scmp.ne.s32.totalorder %s119, %s120
      %p129 = scmp.eq.s32.totalorder %s25, 0
      %p130 = por %p128, %p129
      %p131 = scmp.ne.s32.totalorder %s119, %s120
      %p132 = scmp.eq.s32.totalorder %s26, 1
      %p133 = por %p131, %p132
      %p135 = scmp.ne.s32.totalorder %s120, %s134
      %p136 = scmp.eq.s32.totalorder %s26, 0
      %p137 = por %p135, %p136
      %s139 = sadd.s32 %s138, 1
      %p142 = scmp.eq.s32.totalorder %s20, 1
      %p143 = scmp.ne.s32.totalorder %s138, %s140
      %p144 = scmp.eq.s32.totalorder %s20, 0
      %p145 = por %p143, %p144
      %p146 = scmp.ne.s32.totalorder %s138, %s140
      %p147 = scmp.eq.s32.totalorder %s25, 1
      %p148 = por %p146, %p147
      %p149 = scmp.ne.s32.totalorder %s140, %s141
      %p150 = scmp.eq.s32.totalorder %s25, 0
      %p151 = por %p149, %p150
      %p152 = scmp.ne.s32.totalorder %s140, %s141
      %p153 = scmp.eq.s32.totalorder %s26, 1
      %p154 = por %p152, %p153
      %p156 = scmp.ne.s32.totalorder %s141, %s155
      %p157 = scmp.eq.s32.totalorder %s26, 0
      %p158 = por %p156, %p157
      %s159 = ssub.s32 %s20, %s27
      %p160 = scmp.eq.s32.totalorder %s159, 0
      %s162 = sadd.s32 %s161, 1
      %s163 = scalar_select %p160, %s161, %s162
      %p166 = pneg %p160
      %p167 = scmp.eq.s32.totalorder %s20, 1
      %p168 = por %p166, %p167
      %p169 = scmp.ne.s32.totalorder %s161, %s164
      %p170 = scmp.eq.s32.totalorder %s20, 0
      %p171 = por %p169, %p170
      %p172 = scmp.ne.s32.totalorder %s161, %s164
      %p173 = scmp.eq.s32.totalorder %s25, 1
      %p174 = por %p172, %p173
      %p175 = scmp.ne.s32.totalorder %s164, %s165
      %p176 = scmp.eq.s32.totalorder %s25, 0
      %p177 = por %p175, %p176
      %p178 = scmp.ne.s32.totalorder %s164, %s165
      %p179 = scmp.eq.s32.totalorder %s26, 1
      %p180 = por %p178, %p179
      %p182 = scmp.ne.s32.totalorder %s165, %s181
      %p183 = scmp.eq.s32.totalorder %s26, 0
      %p184 = por %p182, %p183
      %p185 = scmp.le.s32.totalorder 1, %s20
      %p186 = scmp.lt.s32.totalorder %s20, 3
      %p187 = pnand %p185, %p186
      %p188 = pneg %p187
      // Predicated region
      $region9: #{tpu_custom_call.1} parent=5 // pred_check
        _
      $region10: #{tpu_custom_call.1} parent=5 // pred_check_branch
        %190 = sbr.rel (%p187) target = $region12
      $region11: #{tpu_custom_call.1} parent=5 // pred_region
        %s191 = ssub.s32 %s20, 1
        // Predicated region
        $region13: #{tpu_custom_call.1} parent=11 // pred_check
          %p192 = pneg %p67
        $region14: #{tpu_custom_call.1} parent=11 // pred_check_branch
          %194 = sbr.rel (%p192) target = $region16
        $region15: #{tpu_custom_call.1} parent=11 // pred_region
          %s196 = ssub.s32 4096, 4096
          %197 = vsyncadd [#allocation6], %s196
          %s198 = sshll.u32 [#allocation5], 4
          %s199 = int_to_ptr.vmem [resolvable:$true] %s198
          %204 = dma.hbm_to_vmem [thread:$0]  %s1, 4096, %s199, [#allocation6], 256, 256, 16
        $region16: #{tpu_custom_call.1} parent=11 // pred_fallthru
          _
        // Predicated region
        $region17: #{tpu_custom_call.1} parent=11 // pred_check
          %p205 = pneg %p88
        $region18: #{tpu_custom_call.1} parent=11 // pred_check_branch
          %207 = sbr.rel (%p205) target = $region20
        $region19: #{tpu_custom_call.1} parent=11 // pred_region
          %s209 = ssub.s32 3072, 3072
          %210 = vsyncadd [#allocation6], %s209
          %s211 = sshll.u32 [#allocation7], 4
          %s212 = int_to_ptr.vmem [resolvable:$true] %s211
          %217 = dma.hbm_to_vmem [thread:$0]  %s2, 3072, %s212, [#allocation6], 192, 192, 12
        $region20: #{tpu_custom_call.1} parent=11 // pred_fallthru
          _
        // Predicated region
        $region21: #{tpu_custom_call.1} parent=11 // pred_check
          %p218 = pneg %p109
        $region22: #{tpu_custom_call.1} parent=11 // pred_check_branch
          %220 = sbr.rel (%p218) target = $region24
        $region23: #{tpu_custom_call.1} parent=11 // pred_region
          %s222 = ssub.s32 3072, 3072
          %223 = vsyncadd [#allocation9], %s222
          %s224 = sshll.u32 [#allocation8], 4
          %s225 = int_to_ptr.vmem [resolvable:$true] %s224
          %230 = dma.hbm_to_vmem [thread:$0]  %s3, 3072, %s225, [#allocation9], 192, 192, 12
        $region24: #{tpu_custom_call.1} parent=11 // pred_fallthru
          _
        // Predicated region
        $region25: #{tpu_custom_call.1} parent=11 // pred_check
          %p231 = pneg %p130
        $region26: #{tpu_custom_call.1} parent=11 // pred_check_branch
          %233 = sbr.rel (%p231) target = $region28
        $region27: #{tpu_custom_call.1} parent=11 // pred_region
          %s235 = ssub.s32 3072, 3072
          %236 = vsyncadd [#allocation9], %s235
          %s237 = sshll.u32 [#allocation10], 4
          %s238 = int_to_ptr.vmem [resolvable:$true] %s237
          %243 = dma.hbm_to_vmem [thread:$0]  %s4, 3072, %s238, [#allocation9], 192, 192, 12
        $region28: #{tpu_custom_call.1} parent=11 // pred_fallthru
          _
        // Predicated region
        $region29: #{tpu_custom_call.1} parent=11 // pred_check
          %p244 = pneg %p151
        $region30: #{tpu_custom_call.1} parent=11 // pred_check_branch
          %246 = sbr.rel (%p244) target = $region32
        $region31: #{tpu_custom_call.1} parent=11 // pred_region
          _
        $region32: #{tpu_custom_call.1} parent=11 // pred_fallthru
          _
      $region12: #{tpu_custom_call.1} parent=5 // pred_fallthru
        _
      %p247 = scmp.lt.s32.totalorder %s20, 2
      // Predicated region
      $region33: #{tpu_custom_call.1} parent=5 // pred_check
        %p248 = pneg %p247
      $region34: #{tpu_custom_call.1} parent=5 // pred_check_branch
        %250 = sbr.rel (%p248) target = $region36
      $region35: #{tpu_custom_call.1} parent=5 // pred_region
        // Predicated region
        $region37: #{tpu_custom_call.1} parent=35 // pred_check
          %p251 = pneg %p40
        $region38: #{tpu_custom_call.1} parent=35 // pred_check_branch
          %253 = sbr.rel (%p251) target = $region40
        $region39: #{tpu_custom_call.1} parent=35 // pred_region
          %s254 = sand.u32 %s30, 1
          %s255 = scalar_lea.sflag [#allocation3], %s254
          %s256 = sand.u32 %s30, 1
          %s257 = smul.addr %s256, 64
          %s258 = scalar_lea.vmem [#allocation2], %s257
          %s259 = smul.u32 4, %s20
          %s261 = ssub.s32 1024, 1024
          %262 = vsyncadd %s255, %s261
          %s263 = smul.addr %s259, 2
          %s264 = smul.addr %s263, 128
          %s265 = scalar_lea.hbm %s0, %s264
          %s266 = sshll.u32 %s258, 4
          %s267 = int_to_ptr.vmem [resolvable:$true] %s266
          %272 = dma.hbm_to_vmem [thread:$0]  %s265, 1024, %s267, %s255, 128, 128, 8
        $region40: #{tpu_custom_call.1} parent=35 // pred_fallthru
          _
      $region36: #{tpu_custom_call.1} parent=5 // pred_fallthru
        _
      %p273 = scmp.le.s32.totalorder 1, %s20
      %p274 = scmp.lt.s32.totalorder %s20, 3
      %p275 = pnand %p273, %p274
      %p276 = pneg %p275
      // Predicated region
      $region41: #{tpu_custom_call.1} parent=5 // pred_check
        _
      $region42: #{tpu_custom_call.1} parent=5 // pred_check_branch
        %278 = sbr.rel (%p275) target = $region44
      $region43: #{tpu_custom_call.1} parent=5 // pred_region
        %s279 = ssub.s32 %s20, 1
        %s280 = sand.u32 %s33, 1
        %s281 = scalar_lea.sflag [#allocation3], %s280
        %s282 = sand.u32 %s33, 1
        %s283 = smul.addr %s282, 64
        %s284 = scalar_lea.vmem [#allocation2], %s283
        // Predicated region
        $region45: #{tpu_custom_call.1} parent=43 // pred_check
          %p285 = pneg %p46
        $region46: #{tpu_custom_call.1} parent=43 // pred_check_branch
          %287 = sbr.rel (%p285) target = $region48
        $region47: #{tpu_custom_call.1} parent=43 // pred_region
          %288 = dma.done %s281, 1024
        $region48: #{tpu_custom_call.1} parent=43 // pred_fallthru
          _
        // Predicated region
        $region49: #{tpu_custom_call.1} parent=43 // pred_check
          %p289 = pneg %p67
        $region50: #{tpu_custom_call.1} parent=43 // pred_check_branch
          %291 = sbr.rel (%p289) target = $region52
        $region51: #{tpu_custom_call.1} parent=43 // pred_region
          %292 = dma.done [#allocation6], 4096
        $region52: #{tpu_custom_call.1} parent=43 // pred_fallthru
          _
        // Predicated region
        $region53: #{tpu_custom_call.1} parent=43 // pred_check
          %p293 = pneg %p88
        $region54: #{tpu_custom_call.1} parent=43 // pred_check_branch
          %295 = sbr.rel (%p293) target = $region56
        $region55: #{tpu_custom_call.1} parent=43 // pred_region
          %296 = dma.done [#allocation6], 3072
        $region56: #{tpu_custom_call.1} parent=43 // pred_fallthru
          _
        // Predicated region
        $region57: #{tpu_custom_call.1} parent=43 // pred_check
          %p297 = pneg %p109
        $region58: #{tpu_custom_call.1} parent=43 // pred_check_branch
          %299 = sbr.rel (%p297) target = $region60
        $region59: #{tpu_custom_call.1} parent=43 // pred_region
          %300 = dma.done [#allocation9], 3072
        $region60: #{tpu_custom_call.1} parent=43 // pred_fallthru
          _
        // Predicated region
        $region61: #{tpu_custom_call.1} parent=43 // pred_check
          %p301 = pneg %p130
        $region62: #{tpu_custom_call.1} parent=43 // pred_check_branch
          %303 = sbr.rel (%p301) target = $region64
        $region63: #{tpu_custom_call.1} parent=43 // pred_region
          %304 = dma.done [#allocation9], 3072
        $region64: #{tpu_custom_call.1} parent=43 // pred_fallthru
          _
        %s305 = sand.u32 %s33, 1
        %s306 = scalar_lea.sflag [#allocation3], %s305
        %s307 = sand.u32 %s33, 1
        %s308 = smul.addr %s307, 64
        %s309 = scalar_lea.vmem [#allocation2], %s308
        %p310 = pneg %p46
        %p311 = pneg %p43
        %p312 = pneg %p67
        %p313 = pneg %p64
        %p314 = pneg %p88
        %p315 = pneg %p85
        %p316 = pneg %p109
        %p317 = pneg %p106
        %p318 = pneg %p130
        %p319 = pneg %p127
        %p320 = pneg %p151
        %p321 = pneg %p148
        %p322 = pneg %p177
        %p323 = pneg %p174
        %s324 = sand.u32 %s164, 1
        %s325 = scalar_lea.sflag [#allocation4], %s324
        %s326 = sand.u32 %s164, 1
        %s327 = smul.addr %s326, 4
        %s328 = scalar_lea.vmem [#allocation11], %s327
        %s329 = smul.u32 4, %s25
        %v331 = vld [vmem:[%s5] sm:$0x1f]
        %v332 = vld [vmem:[%s284] sm:$0xff]
        %v333 = vld [vmem:[%s284 + $0x8] sm:$0xff]
        %v334 = vld [vmem:[%s284 + $0x10] sm:$0xff]
        %v335 = vld [vmem:[%s284 + $0x18] sm:$0xff]
        %v336 = vld [vmem:[%s284 + $0x20] sm:$0xff]
        %v337 = vld [vmem:[%s284 + $0x28] sm:$0xff]
        %v338 = vld [vmem:[%s284 + $0x30] sm:$0xff]
        %v339 = vld [vmem:[%s284 + $0x38] sm:$0xff]
        %v340 = vlaneseq
        %v341 = vshrl.u32 %v340, 7
        %v342 = vadd.s32 %v341, 8
        %vm343 = vcmp.ge.s32.totalorder %v341, 1
        %vm344 = vcmp.ge.s32.totalorder %v342, 1
        %vm345 = vcmp.ge.s32.totalorder %v341, 2
        %vm346 = vcmp.ge.s32.totalorder %v342, 2
        %vm347 = vcmp.ge.s32.totalorder %v341, 4
        %vm348 = vcmp.ge.s32.totalorder %v342, 4
        %v349 = vpack.c.bf16 %v333, %v332
        %v350 = vpack.c.bf16 %v335, %v334
        %v351 = vpack.c.bf16 %v337, %v336
        %v352 = vpack.c.bf16 %v339, %v338
        %v353 = vld [vmem:[#allocation5] sm:$0xff]
        %v354 = vld [vmem:[#allocation5 + $0x8] sm:$0xff]
        %v355 = vld [vmem:[#allocation5 + $0x10] sm:$0xff]
        %v356 = vld [vmem:[#allocation5 + $0x18] sm:$0xff]
        %v357 = vld [vmem:[#allocation5 + $0x20] sm:$0xff]
        %v358 = vld [vmem:[#allocation5 + $0x28] sm:$0xff]
        %v359 = vld [vmem:[#allocation5 + $0x30] sm:$0xff]
        %v360 = vld [vmem:[#allocation5 + $0x38] sm:$0xff]
        %v361 = vld [vmem:[#allocation5 + $0x40] sm:$0xff]
        %v362 = vld [vmem:[#allocation5 + $0x48] sm:$0xff]
        %v363 = vld [vmem:[#allocation5 + $0x50] sm:$0xff]
        %v364 = vld [vmem:[#allocation5 + $0x58] sm:$0xff]
        %v365 = vld [vmem:[#allocation5 + $0x60] sm:$0xff]
        %v366 = vld [vmem:[#allocation5 + $0x68] sm:$0xff]
        %v367 = vld [vmem:[#allocation5 + $0x70] sm:$0xff]
        %v368 = vld [vmem:[#allocation5 + $0x78] sm:$0xff]
        %v369 = vld [vmem:[#allocation5 + $0x80] sm:$0xff]
        %v370 = vld [vmem:[#allocation5 + $0x88] sm:$0xff]
        %v371 = vld [vmem:[#allocation5 + $0x90] sm:$0xff]
        %v372 = vld [vmem:[#allocation5 + $0x98] sm:$0xff]
        %v373 = vld [vmem:[#allocation5 + $0xa0] sm:$0xff]
        %v374 = vld [vmem:[#allocation5 + $0xa8] sm:$0xff]
        %v375 = vld [vmem:[#allocation5 + $0xb0] sm:$0xff]
        %v376 = vld [vmem:[#allocation5 + $0xb8] sm:$0xff]
        %v377 = vld [vmem:[#allocation5 + $0xc0] sm:$0xff]
        %v378 = vld [vmem:[#allocation5 + $0xc8] sm:$0xff]
        %v379 = vld [vmem:[#allocation5 + $0xd0] sm:$0xff]
        %v380 = vld [vmem:[#allocation5 + $0xd8] sm:$0xff]
        %v381 = vld [vmem:[#allocation5 + $0xe0] sm:$0xff]
        %v382 = vld [vmem:[#allocation5 + $0xe8] sm:$0xff]
        %v383 = vld [vmem:[#allocation5 + $0xf0] sm:$0xff]
        %v384 = vld [vmem:[#allocation5 + $0xf8] sm:$0xff]
        %v417 = vunpack.c.l.b16 %v353
        %v418 = vunpack.c.h.b16 %v353
        %v419 = vunpack.c.l.b16 %v354
        %v420 = vunpack.c.h.b16 %v354
        %v421 = vunpack.c.l.b16 %v355
        %v422 = vunpack.c.h.b16 %v355
        %v423 = vunpack.c.l.b16 %v356
        %v424 = vunpack.c.h.b16 %v356
        %v425 = vunpack.c.l.b16 %v357
        %v426 = vunpack.c.h.b16 %v357
        %v427 = vunpack.c.l.b16 %v358
        %v428 = vunpack.c.h.b16 %v358
        %v429 = vunpack.c.l.b16 %v359
        %v430 = vunpack.c.h.b16 %v359
        %v431 = vunpack.c.l.b16 %v360
        %v432 = vunpack.c.h.b16 %v360
        %v433 = vunpack.c.l.b16 %v361
        %v434 = vunpack.c.h.b16 %v361
        %v435 = vunpack.c.l.b16 %v362
        %v436 = vunpack.c.h.b16 %v362
        %v437 = vunpack.c.l.b16 %v363
        %v438 = vunpack.c.h.b16 %v363
        %v439 = vunpack.c.l.b16 %v364
        %v440 = vunpack.c.h.b16 %v364
        %v441 = vunpack.c.l.b16 %v365
        %v442 = vunpack.c.h.b16 %v365
        %v443 = vunpack.c.l.b16 %v366
        %v444 = vunpack.c.h.b16 %v366
        %v445 = vunpack.c.l.b16 %v367
        %v446 = vunpack.c.h.b16 %v367
        %v447 = vunpack.c.l.b16 %v368
        %v448 = vunpack.c.h.b16 %v368
        %v449 = vunpack.c.l.b16 %v369
        %v450 = vunpack.c.h.b16 %v369
        %v451 = vunpack.c.l.b16 %v370
        %v452 = vunpack.c.h.b16 %v370
        %v453 = vunpack.c.l.b16 %v371
        %v454 = vunpack.c.h.b16 %v371
        %v455 = vunpack.c.l.b16 %v372
        %v456 = vunpack.c.h.b16 %v372
        %v457 = vunpack.c.l.b16 %v373
        %v458 = vunpack.c.h.b16 %v373
        %v459 = vunpack.c.l.b16 %v374
        %v460 = vunpack.c.h.b16 %v374
        %v461 = vunpack.c.l.b16 %v375
        %v462 = vunpack.c.h.b16 %v375
        %v463 = vunpack.c.l.b16 %v376
        %v464 = vunpack.c.h.b16 %v376
        %v465 = vunpack.c.l.b16 %v377
        %v466 = vunpack.c.h.b16 %v377
        %v467 = vunpack.c.l.b16 %v378
        %v468 = vunpack.c.h.b16 %v378
        %v469 = vunpack.c.l.b16 %v379
        %v470 = vunpack.c.h.b16 %v379
        %v471 = vunpack.c.l.b16 %v380
        %v472 = vunpack.c.h.b16 %v380
        %v473 = vunpack.c.l.b16 %v381
        %v474 = vunpack.c.h.b16 %v381
        %v475 = vunpack.c.l.b16 %v382
        %v476 = vunpack.c.h.b16 %v382
        %v477 = vunpack.c.l.b16 %v383
        %v478 = vunpack.c.h.b16 %v383
        %v479 = vunpack.c.l.b16 %v384
        %v480 = vunpack.c.h.b16 %v384
        %v481 = vpack.c.b16 %v421, %v417
        %v482 = vpack.c.b16 %v422, %v418
        %v483 = vpack.c.b16 %v423, %v419
        %v484 = vpack.c.b16 %v424, %v420
        %v485 = vpack.c.b16 %v429, %v425
        %v486 = vpack.c.b16 %v430, %v426
        %v487 = vpack.c.b16 %v431, %v427
        %v488 = vpack.c.b16 %v432, %v428
        %v489 = vpack.c.b16 %v437, %v433
        %v490 = vpack.c.b16 %v438, %v434
        %v491 = vpack.c.b16 %v439, %v435
        %v492 = vpack.c.b16 %v440, %v436
        %v493 = vpack.c.b16 %v445, %v441
        %v494 = vpack.c.b16 %v446, %v442
        %v495 = vpack.c.b16 %v447, %v443
        %v496 = vpack.c.b16 %v448, %v444
        %v497 = vpack.c.b16 %v453, %v449
        %v498 = vpack.c.b16 %v454, %v450
        %v499 = vpack.c.b16 %v455, %v451
        %v500 = vpack.c.b16 %v456, %v452
        %v501 = vpack.c.b16 %v461, %v457
        %v502 = vpack.c.b16 %v462, %v458
        %v503 = vpack.c.b16 %v463, %v459
        %v504 = vpack.c.b16 %v464, %v460
        %v505 = vpack.c.b16 %v469, %v465
        %v506 = vpack.c.b16 %v470, %v466
        %v507 = vpack.c.b16 %v471, %v467
        %v508 = vpack.c.b16 %v472, %v468
        %v509 = vpack.c.b16 %v477, %v473
        %v510 = vpack.c.b16 %v478, %v474
        %v511 = vpack.c.b16 %v479, %v475
        %v512 = vpack.c.b16 %v480, %v476
        %545 = vmatprep.subr.bf16.mxu0 %v510
        %546 = vmatpush1.bf16.msra.mxu0 %v509
        %547 = vmatprep.subr.bf16.mxu0 %v506
        %548 = vmatpush1.bf16.msra.mxu0 %v505
        %549 = vmatprep.subr.bf16.mxu0 %v502
        %550 = vmatpush1.bf16.msra.mxu0 %v501
        %551 = vmatprep.subr.bf16.mxu0 %v498
        %552 = vmatpush1.bf16.msra.mxu0 %v497
        %553 = vmatprep.subr.bf16.mxu0 %v494
        %554 = vmatpush1.bf16.msra.mxu0 %v493
        %555 = vmatprep.subr.bf16.mxu0 %v490
        %556 = vmatpush1.bf16.msra.mxu0 %v489
        %557 = vmatprep.subr.bf16.mxu0 %v486
        %558 = vmatpush1.bf16.msra.mxu0 %v485
        %559 = vmatprep.subr.bf16.mxu0 %v482
        %560 = vmatpush1.bf16.msra.mxu0 %v481
        %561 = vmatprep.subr.bf16.mxu0 0
        %562 = vmatpush2.bf16.msra.mxu0 0
        %563 = vmatprep.subr.bf16.mxu0 0
        %564 = vmatpush2.bf16.msra.mxu0 0
        %565 = vmatprep.subr.bf16.mxu0 0
        %566 = vmatpush2.bf16.msra.mxu0 0
        %567 = vmatprep.subr.bf16.mxu0 0
        %568 = vmatpush2.bf16.msra.mxu0 0
        %569 = vmatprep.subr.bf16.mxu0 0
        %570 = vmatpush2.bf16.msra.mxu0 0
        %571 = vmatprep.subr.bf16.mxu0 0
        %572 = vmatpush2.bf16.msra.mxu0 0
        %573 = vmatprep.subr.bf16.mxu0 0
        %574 = vmatpush2.bf16.msra.mxu0 0
        %575 = vmatprep.subr.bf16.mxu0 0
        %576 = vmatpush2.bf16.msra.mxu0 0
        %577 = vmatprep.mubr.bf16.mxu0 0
        %578 = vmatmul.mubr.bf16.gmra.mxu0 %v349
        %v579 = vpop.f32.mrf.mxu0
        %v580 = vadd.f32 0.0, %v579
        %v581 = vpop.f32.mrf.mxu0
        %v582 = vadd.f32 0.0, %v581
        %v583 = vpop.f32.mrf.mxu0
        %v584 = vadd.f32 0.0, %v583
        %v585 = vpop.f32.mrf.mxu0
        %v586 = vadd.f32 0.0, %v585
        %587 = vmatprep.mubr.bf16.mxu0 0
        %588 = vmatmul.mubr.bf16.gmra.mxu0 %v350
        %v589 = vpop.f32.mrf.mxu0
        %v590 = vadd.f32 0.0, %v589
        %v591 = vpop.f32.mrf.mxu0
        %v592 = vadd.f32 0.0, %v591
        %v593 = vpop.f32.mrf.mxu0
        %v594 = vadd.f32 0.0, %v593
        %v595 = vpop.f32.mrf.mxu0
        %v596 = vadd.f32 0.0, %v595
        %597 = vmatprep.mubr.bf16.mxu0 0
        %598 = vmatmul.mubr.bf16.gmra.mxu0 %v351
        %v599 = vpop.f32.mrf.mxu0
        %v600 = vadd.f32 0.0, %v599
        %v601 = vpop.f32.mrf.mxu0
        %v602 = vadd.f32 0.0, %v601
        %v603 = vpop.f32.mrf.mxu0
        %v604 = vadd.f32 0.0, %v603
        %v605 = vpop.f32.mrf.mxu0
        %v606 = vadd.f32 0.0, %v605
        %607 = vmatprep.mubr.bf16.mxu0 0
        %608 = vmatmul.mubr.bf16.gmra.mxu0 %v352
        %v609 = vpop.f32.mrf.mxu0
        %v610 = vadd.f32 0.0, %v609
        %v611 = vpop.f32.mrf.mxu0
        %v612 = vadd.f32 0.0, %v611
        %v613 = vpop.f32.mrf.mxu0
        %v614 = vadd.f32 0.0, %v613
        %v615 = vpop.f32.mrf.mxu0
        %v616 = vadd.f32 0.0, %v615
        %617 = vdwg.mxu0
        %618 = vmatprep.subr.bf16.mxu0 %v512
        %619 = vmatpush1.bf16.msra.mxu0 %v511
        %620 = vmatprep.subr.bf16.mxu0 %v508
        %621 = vmatpush1.bf16.msra.mxu0 %v507
        %622 = vmatprep.subr.bf16.mxu0 %v504
        %623 = vmatpush1.bf16.msra.mxu0 %v503
        %624 = vmatprep.subr.bf16.mxu0 %v500
        %625 = vmatpush1.bf16.msra.mxu0 %v499
        %626 = vmatprep.subr.bf16.mxu0 %v496
        %627 = vmatpush1.bf16.msra.mxu0 %v495
        %628 = vmatprep.subr.bf16.mxu0 %v492
        %629 = vmatpush1.bf16.msra.mxu0 %v491
        %630 = vmatprep.subr.bf16.mxu0 %v488
        %631 = vmatpush1.bf16.msra.mxu0 %v487
        %632 = vmatprep.subr.bf16.mxu0 %v484
        %633 = vmatpush1.bf16.msra.mxu0 %v483
        %634 = vmatprep.subr.bf16.mxu0 0
        %635 = vmatpush2.bf16.msra.mxu0 0
        %636 = vmatprep.subr.bf16.mxu0 0
        %637 = vmatpush2.bf16.msra.mxu0 0
        %638 = vmatprep.subr.bf16.mxu0 0
        %639 = vmatpush2.bf16.msra.mxu0 0
        %640 = vmatprep.subr.bf16.mxu0 0
        %641 = vmatpush2.bf16.msra.mxu0 0
        %642 = vmatprep.subr.bf16.mxu0 0
        %643 = vmatpush2.bf16.msra.mxu0 0
        %644 = vmatprep.subr.bf16.mxu0 0
        %645 = vmatpush2.bf16.msra.mxu0 0
        %646 = vmatprep.subr.bf16.mxu0 0
        %647 = vmatpush2.bf16.msra.mxu0 0
        %648 = vmatprep.subr.bf16.mxu0 0
        %649 = vmatpush2.bf16.msra.mxu0 0
        %650 = vmatprep.mubr.bf16.mxu0 0
        %651 = vmatmul.mubr.bf16.gmra.mxu0 %v349
        %v652 = vpop.f32.mrf.mxu0
        %v653 = vadd.f32 0.0, %v652
        %v654 = vpop.f32.mrf.mxu0
        %v655 = vadd.f32 0.0, %v654
        %v656 = vpop.f32.mrf.mxu0
        %v657 = vadd.f32 0.0, %v656
        %v658 = vpop.f32.mrf.mxu0
        %v659 = vadd.f32 0.0, %v658
        %660 = vmatprep.mubr.bf16.mxu0 0
        %661 = vmatmul.mubr.bf16.gmra.mxu0 %v350
        %v662 = vpop.f32.mrf.mxu0
        %v663 = vadd.f32 0.0, %v662
        %v664 = vpop.f32.mrf.mxu0
        %v665 = vadd.f32 0.0, %v664
        %v666 = vpop.f32.mrf.mxu0
        %v667 = vadd.f32 0.0, %v666
        %v668 = vpop.f32.mrf.mxu0
        %v669 = vadd.f32 0.0, %v668
        %670 = vmatprep.mubr.bf16.mxu0 0
        %671 = vmatmul.mubr.bf16.gmra.mxu0 %v351
        %v672 = vpop.f32.mrf.mxu0
        %v673 = vadd.f32 0.0, %v672
        %v674 = vpop.f32.mrf.mxu0
        %v675 = vadd.f32 0.0, %v674
        %v676 = vpop.f32.mrf.mxu0
        %v677 = vadd.f32 0.0, %v676
        %v678 = vpop.f32.mrf.mxu0
        %v679 = vadd.f32 0.0, %v678
        %680 = vmatprep.mubr.bf16.mxu0 0
        %681 = vmatmul.mubr.bf16.gmra.mxu0 %v352
        %v682 = vpop.f32.mrf.mxu0
        %v683 = vadd.f32 0.0, %v682
        %v684 = vpop.f32.mrf.mxu0
        %v685 = vadd.f32 0.0, %v684
        %v686 = vpop.f32.mrf.mxu0
        %v687 = vadd.f32 0.0, %v686
        %v688 = vpop.f32.mrf.mxu0
        %v689 = vadd.f32 0.0, %v688
        %690 = vdwg.mxu0
        %v691 = vrot.slane %v580, 6
        %v692 = vrot.slane %v584, 6
        %v693 = vrot.slane %v590, 6
        %v694 = vrot.slane %v594, 6
        %v695 = vrot.slane %v600, 6
        %v696 = vrot.slane %v604, 6
        %v697 = vrot.slane %v610, 6
        %v698 = vrot.slane %v614, 6
        %vm699 = vcmp.lt.s32.totalorder %v341, 2
        %v700 = vsel %vm699, %v697, %v698
        %v701 = vsel %vm699, %v696, %v697
        %v702 = vsel %vm699, %v695, %v696
        %v703 = vsel %vm699, %v694, %v695
        %v704 = vsel %vm699, %v693, %v694
        %v705 = vsel %vm699, %v692, %v693
        %v706 = vsel %vm699, %v691, %v692
        %v707 = vsel %vm699, %v698, %v691
        %v708 = vsel %vm345, %v707, 0.0
        %v709 = vsel %vm346, %v706, 0.0
        %v710 = vsel %vm345, %v705, 0.0
        %v711 = vsel %vm346, %v704, 0.0
        %v712 = vsel %vm345, %v703, 0.0
        %v713 = vsel %vm346, %v702, 0.0
        %v714 = vsel %vm345, %v701, 0.0
        %v715 = vsel %vm346, %v700, 0.0
        %v716 = vadd.f32 %v653, %v708
        %v717 = vadd.f32 %v657, %v709
        %v718 = vadd.f32 %v663, %v710
        %v719 = vadd.f32 %v667, %v711
        %v720 = vadd.f32 %v673, %v712
        %v721 = vadd.f32 %v677, %v713
        %v722 = vadd.f32 %v683, %v714
        %v723 = vadd.f32 %v687, %v715
        %v724 = vrot.slane %v582, 7
        %v725 = vrot.slane %v586, 7
        %v726 = vrot.slane %v592, 7
        %v727 = vrot.slane %v596, 7
        %v728 = vrot.slane %v602, 7
        %v729 = vrot.slane %v606, 7
        %v730 = vrot.slane %v612, 7
        %v731 = vrot.slane %v616, 7
        %vm732 = vcmp.lt.s32.totalorder %v341, 1
        %v733 = vsel %vm732, %v730, %v731
        %v734 = vsel %vm732, %v729, %v730
        %v735 = vsel %vm732, %v728, %v729
        %v736 = vsel %vm732, %v727, %v728
        %v737 = vsel %vm732, %v726, %v727
        %v738 = vsel %vm732, %v725, %v726
        %v739 = vsel %vm732, %v724, %v725
        %v740 = vsel %vm732, %v731, %v724
        %v741 = vsel %vm343, %v740, 0.0
        %v742 = vsel %vm344, %v739, 0.0
        %v743 = vsel %vm343, %v738, 0.0
        %v744 = vsel %vm344, %v737, 0.0
        %v745 = vsel %vm343, %v736, 0.0
        %v746 = vsel %vm344, %v735, 0.0
        %v747 = vsel %vm343, %v734, 0.0
        %v748 = vsel %vm344, %v733, 0.0
        %v749 = vadd.f32 %v716, %v741
        %v750 = vadd.f32 %v717, %v742
        %v751 = vadd.f32 %v718, %v743
        %v752 = vadd.f32 %v719, %v744
        %v753 = vadd.f32 %v720, %v745
        %v754 = vadd.f32 %v721, %v746
        %v755 = vadd.f32 %v722, %v747
        %v756 = vadd.f32 %v723, %v748
        %v757 = vlaneseq
        %v758 = vshrl.u32 %v757, 7
        %v759 = vsub.s32 0, %v758
        %v760 = vrot.slane %v331, %v759
        %v761 = vadd.f32 %v749, %v760
        %v762 = vadd.f32 %v750, %v760
        %v763 = vadd.f32 %v751, %v760
        %v764 = vadd.f32 %v752, %v760
        %v765 = vadd.f32 %v753, %v760
        %v766 = vadd.f32 %v754, %v760
        %v767 = vadd.f32 %v755, %v760
        %v768 = vadd.f32 %v756, %v760
        %v769 = vmax.f32 %v761, 0.0
        %v770 = vmax.f32 %v762, 0.0
        %v771 = vmax.f32 %v763, 0.0
        %v772 = vmax.f32 %v764, 0.0
        %v773 = vmax.f32 %v765, 0.0
        %v774 = vmax.f32 %v766, 0.0
        %v775 = vmax.f32 %v767, 0.0
        %v776 = vmax.f32 %v768, 0.0
        %v777 = vpack.c.bf16 %v770, %v769
        %v778 = vpack.c.bf16 %v772, %v771
        %v779 = vpack.c.bf16 %v774, %v773
        %v780 = vpack.c.bf16 %v776, %v775
        %v781 = vld [vmem:[#allocation7] sm:$0xff]
        %v782 = vld [vmem:[#allocation7 + $0x8] sm:$0xf]
        %v783 = vld [vmem:[#allocation7 + $0xc] sm:$0xff]
        %v784 = vld [vmem:[#allocation7 + $0x14] sm:$0xf]
        %v785 = vld [vmem:[#allocation7 + $0x18] sm:$0xff]
        %v786 = vld [vmem:[#allocation7 + $0x20] sm:$0xf]
        %v787 = vld [vmem:[#allocation7 + $0x24] sm:$0xff]
        %v788 = vld [vmem:[#allocation7 + $0x2c] sm:$0xf]
        %v789 = vld [vmem:[#allocation7 + $0x30] sm:$0xff]
        %v790 = vld [vmem:[#allocation7 + $0x38] sm:$0xf]
        %v791 = vld [vmem:[#allocation7 + $0x3c] sm:$0xff]
        %v792 = vld [vmem:[#allocation7 + $0x44] sm:$0xf]
        %v793 = vld [vmem:[#allocation7 + $0x48] sm:$0xff]
        %v794 = vld [vmem:[#allocation7 + $0x50] sm:$0xf]
        %v795 = vld [vmem:[#allocation7 + $0x54] sm:$0xff]
        %v796 = vld [vmem:[#allocation7 + $0x5c] sm:$0xf]
        %v797 = vld [vmem:[#allocation7 + $0x60] sm:$0xff]
        %v798 = vld [vmem:[#allocation7 + $0x68] sm:$0xf]
        %v799 = vld [vmem:[#allocation7 + $0x6c] sm:$0xff]
        %v800 = vld [vmem:[#allocation7 + $0x74] sm:$0xf]
        %v801 = vld [vmem:[#allocation7 + $0x78] sm:$0xff]
        %v802 = vld [vmem:[#allocation7 + $0x80] sm:$0xf]
        %v803 = vld [vmem:[#allocation7 + $0x84] sm:$0xff]
        %v804 = vld [vmem:[#allocation7 + $0x8c] sm:$0xf]
        %v805 = vld [vmem:[#allocation7 + $0x90] sm:$0xff]
        %v806 = vld [vmem:[#allocation7 + $0x98] sm:$0xf]
        %v807 = vld [vmem:[#allocation7 + $0x9c] sm:$0xff]
        %v808 = vld [vmem:[#allocation7 + $0xa4] sm:$0xf]
        %v809 = vld [vmem:[#allocation7 + $0xa8] sm:$0xff]
        %v810 = vld [vmem:[#allocation7 + $0xb0] sm:$0xf]
        %v811 = vld [vmem:[#allocation7 + $0xb4] sm:$0xff]
        %v812 = vld [vmem:[#allocation7 + $0xbc] sm:$0xf]
        %v845 = vunpack.c.l.b16 %v781
        %v846 = vunpack.c.h.b16 %v781
        %v847 = vunpack.c.l.b16 %v782
        %v848 = vunpack.c.l.b16 %v783
        %v849 = vunpack.c.h.b16 %v783
        %v850 = vunpack.c.l.b16 %v784
        %v851 = vunpack.c.l.b16 %v785
        %v852 = vunpack.c.h.b16 %v785
        %v853 = vunpack.c.l.b16 %v786
        %v854 = vunpack.c.l.b16 %v787
        %v855 = vunpack.c.h.b16 %v787
        %v856 = vunpack.c.l.b16 %v788
        %v857 = vunpack.c.l.b16 %v789
        %v858 = vunpack.c.h.b16 %v789
        %v859 = vunpack.c.l.b16 %v790
        %v860 = vunpack.c.l.b16 %v791
        %v861 = vunpack.c.h.b16 %v791
        %v862 = vunpack.c.l.b16 %v792
        %v863 = vunpack.c.l.b16 %v793
        %v864 = vunpack.c.h.b16 %v793
        %v865 = vunpack.c.l.b16 %v794
        %v866 = vunpack.c.l.b16 %v795
        %v867 = vunpack.c.h.b16 %v795
        %v868 = vunpack.c.l.b16 %v796
        %v869 = vunpack.c.l.b16 %v797
        %v870 = vunpack.c.h.b16 %v797
        %v871 = vunpack.c.l.b16 %v798
        %v872 = vunpack.c.l.b16 %v799
        %v873 = vunpack.c.h.b16 %v799
        %v874 = vunpack.c.l.b16 %v800
        %v875 = vunpack.c.l.b16 %v801
        %v876 = vunpack.c.h.b16 %v801
        %v877 = vunpack.c.l.b16 %v802
        %v878 = vunpack.c.l.b16 %v803
        %v879 = vunpack.c.h.b16 %v803
        %v880 = vunpack.c.l.b16 %v804
        %v881 = vunpack.c.l.b16 %v805
        %v882 = vunpack.c.h.b16 %v805
        %v883 = vunpack.c.l.b16 %v806
        %v884 = vunpack.c.l.b16 %v807
        %v885 = vunpack.c.h.b16 %v807
        %v886 = vunpack.c.l.b16 %v808
        %v887 = vunpack.c.l.b16 %v809
        %v888 = vunpack.c.h.b16 %v809
        %v889 = vunpack.c.l.b16 %v810
        %v890 = vunpack.c.l.b16 %v811
        %v891 = vunpack.c.h.b16 %v811
        %v892 = vunpack.c.l.b16 %v812
        %v893 = vpack.c.b16 %v848, %v845
        %v894 = vpack.c.b16 %v849, %v846
        %v895 = vpack.c.b16 %v850, %v847
        %v896 = vpack.c.b16 %v854, %v851
        %v897 = vpack.c.b16 %v855, %v852
        %v898 = vpack.c.b16 %v856, %v853
        %v899 = vpack.c.b16 %v860, %v857
        %v900 = vpack.c.b16 %v861, %v858
        %v901 = vpack.c.b16 %v862, %v859
        %v902 = vpack.c.b16 %v866, %v863
        %v903 = vpack.c.b16 %v867, %v864
        %v904 = vpack.c.b16 %v868, %v865
        %v905 = vpack.c.b16 %v872, %v869
        %v906 = vpack.c.b16 %v873, %v870
        %v907 = vpack.c.b16 %v874, %v871
        %v908 = vpack.c.b16 %v878, %v875
        %v909 = vpack.c.b16 %v879, %v876
        %v910 = vpack.c.b16 %v880, %v877
        %v911 = vpack.c.b16 %v884, %v881
        %v912 = vpack.c.b16 %v885, %v882
        %v913 = vpack.c.b16 %v886, %v883
        %v914 = vpack.c.b16 %v890, %v887
        %v915 = vpack.c.b16 %v891, %v888
        %v916 = vpack.c.b16 %v892, %v889
        %941 = vmatprep.subr.bf16.mxu0 %v915
        %942 = vmatpush1.bf16.msra.mxu0 %v914
        %943 = vmatprep.subr.bf16.mxu0 %v912
        %944 = vmatpush1.bf16.msra.mxu0 %v911
        %945 = vmatprep.subr.bf16.mxu0 %v909
        %946 = vmatpush1.bf16.msra.mxu0 %v908
        %947 = vmatprep.subr.bf16.mxu0 %v906
        %948 = vmatpush1.bf16.msra.mxu0 %v905
        %949 = vmatprep.subr.bf16.mxu0 %v903
        %950 = vmatpush1.bf16.msra.mxu0 %v902
        %951 = vmatprep.subr.bf16.mxu0 %v900
        %952 = vmatpush1.bf16.msra.mxu0 %v899
        %953 = vmatprep.subr.bf16.mxu0 %v897
        %954 = vmatpush1.bf16.msra.mxu0 %v896
        %955 = vmatprep.subr.bf16.mxu0 %v894
        %956 = vmatpush1.bf16.msra.mxu0 %v893
        %957 = vmatprep.subr.bf16.mxu0 0
        %958 = vmatpush2.bf16.msra.mxu0 0
        %959 = vmatprep.subr.bf16.mxu0 0
        %960 = vmatpush2.bf16.msra.mxu0 0
        %961 = vmatprep.subr.bf16.mxu0 0
        %962 = vmatpush2.bf16.msra.mxu0 0
        %963 = vmatprep.subr.bf16.mxu0 0
        %964 = vmatpush2.bf16.msra.mxu0 0
        %965 = vmatprep.subr.bf16.mxu0 0
        %966 = vmatpush2.bf16.msra.mxu0 0
        %967 = vmatprep.subr.bf16.mxu0 0
        %968 = vmatpush2.bf16.msra.mxu0 0
        %969 = vmatprep.subr.bf16.mxu0 0
        %970 = vmatpush2.bf16.msra.mxu0 0
        %971 = vmatprep.subr.bf16.mxu0 0
        %972 = vmatpush2.bf16.msra.mxu0 0
        %973 = vmatprep.mubr.bf16.mxu0 0
        %974 = vmatmul.mubr.bf16.gmra.mxu0 %v777
        %v975 = vpop.f32.mrf.mxu0
        %v976 = vadd.f32 0.0, %v975
        %v977 = vpop.f32.mrf.mxu0
        %v978 = vadd.f32 0.0, %v977
        %v979 = vpop.f32.mrf.mxu0
        %v980 = vadd.f32 0.0, %v979
        %v981 = vpop.f32.mrf.mxu0
        %v982 = vadd.f32 0.0, %v981
        %983 = vmatprep.mubr.bf16.mxu0 0
        %984 = vmatmul.mubr.bf16.gmra.mxu0 %v778
        %v985 = vpop.f32.mrf.mxu0
        %v986 = vadd.f32 0.0, %v985
        %v987 = vpop.f32.mrf.mxu0
        %v988 = vadd.f32 0.0, %v987
        %v989 = vpop.f32.mrf.mxu0
        %v990 = vadd.f32 0.0, %v989
        %v991 = vpop.f32.mrf.mxu0
        %v992 = vadd.f32 0.0, %v991
        %993 = vmatprep.mubr.bf16.mxu0 0
        %994 = vmatmul.mubr.bf16.gmra.mxu0 %v779
        %v995 = vpop.f32.mrf.mxu0
        %v996 = vadd.f32 0.0, %v995
        %v997 = vpop.f32.mrf.mxu0
        %v998 = vadd.f32 0.0, %v997
        %v999 = vpop.f32.mrf.mxu0
        %v1000 = vadd.f32 0.0, %v999
        %v1001 = vpop.f32.mrf.mxu0
        %v1002 = vadd.f32 0.0, %v1001
        %1003 = vmatprep.mubr.bf16.mxu0 0
        %1004 = vmatmul.mubr.bf16.gmra.mxu0 %v780
        %v1005 = vpop.f32.mrf.mxu0
        %v1006 = vadd.f32 0.0, %v1005
        %v1007 = vpop.f32.mrf.mxu0
        %v1008 = vadd.f32 0.0, %v1007
        %v1009 = vpop.f32.mrf.mxu0
        %v1010 = vadd.f32 0.0, %v1009
        %v1011 = vpop.f32.mrf.mxu0
        %v1012 = vadd.f32 0.0, %v1011
        %1013 = vdwg.mxu0
        %1014 = vmatprep.subr.bf16.mxu0 0
        %1015 = vmatpush1.bf16.msra.mxu0 %v916
        %1016 = vmatprep.subr.bf16.mxu0 0
        %1017 = vmatpush1.bf16.msra.mxu0 %v913
        %1018 = vmatprep.subr.bf16.mxu0 0
        %1019 = vmatpush1.bf16.msra.mxu0 %v910
        %1020 = vmatprep.subr.bf16.mxu0 0
        %1021 = vmatpush1.bf16.msra.mxu0 %v907
        %1022 = vmatprep.subr.bf16.mxu0 0
        %1023 = vmatpush1.bf16.msra.mxu0 %v904
        %1024 = vmatprep.subr.bf16.mxu0 0
        %1025 = vmatpush1.bf16.msra.mxu0 %v901
        %1026 = vmatprep.subr.bf16.mxu0 0
        %1027 = vmatpush1.bf16.msra.mxu0 %v898
        %1028 = vmatprep.subr.bf16.mxu0 0
        %1029 = vmatpush1.bf16.msra.mxu0 %v895
        %1030 = vmatprep.subr.bf16.mxu0 0
        %1031 = vmatpush2.bf16.msra.mxu0 0
        %1032 = vmatprep.subr.bf16.mxu0 0
        %1033 = vmatpush2.bf16.msra.mxu0 0
        %1034 = vmatprep.subr.bf16.mxu0 0
        %1035 = vmatpush2.bf16.msra.mxu0 0
        %1036 = vmatprep.subr.bf16.mxu0 0
        %1037 = vmatpush2.bf16.msra.mxu0 0
        %1038 = vmatprep.subr.bf16.mxu0 0
        %1039 = vmatpush2.bf16.msra.mxu0 0
        %1040 = vmatprep.subr.bf16.mxu0 0
        %1041 = vmatpush2.bf16.msra.mxu0 0
        %1042 = vmatprep.subr.bf16.mxu0 0
        %1043 = vmatpush2.bf16.msra.mxu0 0
        %1044 = vmatprep.subr.bf16.mxu0 0
        %1045 = vmatpush2.bf16.msra.mxu0 0
        %1046 = vmatprep.mubr.bf16.mxu0 0
        %1047 = vmatmul.mubr.bf16.gmra.mxu0 %v777
        %v1048 = vpop.f32.mrf.mxu0
        %v1049 = vadd.f32 0.0, %v1048
        %v1050 = vpop.f32.mrf.mxu0
        %v1051 = vpop.f32.mrf.mxu0
        %v1052 = vadd.f32 0.0, %v1051
        %v1053 = vpop.f32.mrf.mxu0
        %1054 = vmatprep.mubr.bf16.mxu0 0
        %1055 = vmatmul.mubr.bf16.gmra.mxu0 %v778
        %v1056 = vpop.f32.mrf.mxu0
        %v1057 = vadd.f32 0.0, %v1056
        %v1058 = vpop.f32.mrf.mxu0
        %v1059 = vpop.f32.mrf.mxu0
        %v1060 = vadd.f32 0.0, %v1059
        %v1061 = vpop.f32.mrf.mxu0
        %1062 = vmatprep.mubr.bf16.mxu0 0
        %1063 = vmatmul.mubr.bf16.gmra.mxu0 %v779
        %v1064 = vpop.f32.mrf.mxu0
        %v1065 = vadd.f32 0.0, %v1064
        %v1066 = vpop.f32.mrf.mxu0
        %v1067 = vpop.f32.mrf.mxu0
        %v1068 = vadd.f32 0.0, %v1067
        %v1069 = vpop.f32.mrf.mxu0
        %1070 = vmatprep.mubr.bf16.mxu0 0
        %1071 = vmatmul.mubr.bf16.gmra.mxu0 %v780
        %v1072 = vpop.f32.mrf.mxu0
        %v1073 = vadd.f32 0.0, %v1072
        %v1074 = vpop.f32.mrf.mxu0
        %v1075 = vpop.f32.mrf.mxu0
        %v1076 = vadd.f32 0.0, %v1075
        %v1077 = vpop.f32.mrf.mxu0
        %1078 = vdwg.mxu0
        %v1079 = vrot.slane %v976, 6
        %v1080 = vrot.slane %v980, 6
        %v1081 = vrot.slane %v986, 6
        %v1082 = vrot.slane %v990, 6
        %v1083 = vrot.slane %v996, 6
        %v1084 = vrot.slane %v1000, 6
        %v1085 = vrot.slane %v1006, 6
        %v1086 = vrot.slane %v1010, 6
        %v1087 = vsel %vm699, %v1085, %v1086
        %v1088 = vsel %vm699, %v1084, %v1085
        %v1089 = vsel %vm699, %v1083, %v1084
        %v1090 = vsel %vm699, %v1082, %v1083
        %v1091 = vsel %vm699, %v1081, %v1082
        %v1092 = vsel %vm699, %v1080, %v1081
        %v1093 = vsel %vm699, %v1079, %v1080
        %v1094 = vsel %vm699, %v1086, %v1079
        %v1095 = vsel %vm345, %v1094, 0.0
        %v1096 = vsel %vm346, %v1093, 0.0
        %v1097 = vsel %vm345, %v1092, 0.0
        %v1098 = vsel %vm346, %v1091, 0.0
        %v1099 = vsel %vm345, %v1090, 0.0
        %v1100 = vsel %vm346, %v1089, 0.0
        %v1101 = vsel %vm345, %v1088, 0.0
        %v1102 = vsel %vm346, %v1087, 0.0
        %v1103 = vadd.f32 %v1049, %v1095
        %v1104 = vadd.f32 %v1052, %v1096
        %v1105 = vadd.f32 %v1057, %v1097
        %v1106 = vadd.f32 %v1060, %v1098
        %v1107 = vadd.f32 %v1065, %v1099
        %v1108 = vadd.f32 %v1068, %v1100
        %v1109 = vadd.f32 %v1073, %v1101
        %v1110 = vadd.f32 %v1076, %v1102
        %v1111 = vrot.slane %v978, 7
        %v1112 = vrot.slane %v982, 7
        %v1113 = vrot.slane %v988, 7
        %v1114 = vrot.slane %v992, 7
        %v1115 = vrot.slane %v998, 7
        %v1116 = vrot.slane %v1002, 7
        %v1117 = vrot.slane %v1008, 7
        %v1118 = vrot.slane %v1012, 7
        %v1119 = vsel %vm732, %v1117, %v1118
        %v1120 = vsel %vm732, %v1116, %v1117
        %v1121 = vsel %vm732, %v1115, %v1116
        %v1122 = vsel %vm732, %v1114, %v1115
        %v1123 = vsel %vm732, %v1113, %v1114
        %v1124 = vsel %vm732, %v1112, %v1113
        %v1125 = vsel %vm732, %v1111, %v1112
        %v1126 = vsel %vm732, %v1118, %v1111
        %v1127 = vsel %vm343, %v1126, 0.0
        %v1128 = vsel %vm344, %v1125, 0.0
        %v1129 = vsel %vm343, %v1124, 0.0
        %v1130 = vsel %vm344, %v1123, 0.0
        %v1131 = vsel %vm343, %v1122, 0.0
        %v1132 = vsel %vm344, %v1121, 0.0
        %v1133 = vsel %vm343, %v1120, 0.0
        %v1134 = vsel %vm344, %v1119, 0.0
        %v1135 = vadd.f32 %v1103, %v1127
        %v1136 = vadd.f32 %v1104, %v1128
        %v1137 = vadd.f32 %v1105, %v1129
        %v1138 = vadd.f32 %v1106, %v1130
        %v1139 = vadd.f32 %v1107, %v1131
        %v1140 = vadd.f32 %v1108, %v1132
        %v1141 = vadd.f32 %v1109, %v1133
        %v1142 = vadd.f32 %v1110, %v1134
        %v1143 = vlaneseq
        %v1144 = vshrl.u32 %v1143, 7
        %v1145 = vsub.s32 1, %v1144
        %v1146 = vrot.slane %v331, %v1145
        %v1147 = vadd.f32 %v1135, %v1146
        %v1148 = vadd.f32 %v1136, %v1146
        %v1149 = vadd.f32 %v1137, %v1146
        %v1150 = vadd.f32 %v1138, %v1146
        %v1151 = vadd.f32 %v1139, %v1146
        %v1152 = vadd.f32 %v1140, %v1146
        %v1153 = vadd.f32 %v1141, %v1146
        %v1154 = vadd.f32 %v1142, %v1146
        %v1155 = vmax.f32 %v1147, 0.0
        %v1156 = vmax.f32 %v1148, 0.0
        %v1157 = vmax.f32 %v1149, 0.0
        %v1158 = vmax.f32 %v1150, 0.0
        %v1159 = vmax.f32 %v1151, 0.0
        %v1160 = vmax.f32 %v1152, 0.0
        %v1161 = vmax.f32 %v1153, 0.0
        %v1162 = vmax.f32 %v1154, 0.0
        %v1163 = vlaneseq
        %v1164 = vshrl.u32 %v1163, 7
        %v1165 = vsub.s32 2, %v1164
        %v1166 = vrot.slane %v331, %v1165
        %v1167 = vadd.f32 %v655, %v1166
        %v1168 = vadd.f32 %v659, %v1166
        %v1169 = vadd.f32 %v665, %v1166
        %v1170 = vadd.f32 %v669, %v1166
        %v1171 = vadd.f32 %v675, %v1166
        %v1172 = vadd.f32 %v679, %v1166
        %v1173 = vadd.f32 %v685, %v1166
        %v1174 = vadd.f32 %v689, %v1166
        %v1175 = vadd.f32 %v1155, %v1167
        %v1176 = vadd.f32 %v1156, %v1168
        %v1177 = vadd.f32 %v1157, %v1169
        %v1178 = vadd.f32 %v1158, %v1170
        %v1179 = vadd.f32 %v1159, %v1171
        %v1180 = vadd.f32 %v1160, %v1172
        %v1181 = vadd.f32 %v1161, %v1173
        %v1182 = vadd.f32 %v1162, %v1174
        %v1183 = vmax.f32 %v1175, 0.0
        %v1184 = vmax.f32 %v1176, 0.0
        %v1185 = vmax.f32 %v1177, 0.0
        %v1186 = vmax.f32 %v1178, 0.0
        %v1187 = vmax.f32 %v1179, 0.0
        %v1188 = vmax.f32 %v1180, 0.0
        %v1189 = vmax.f32 %v1181, 0.0
        %v1190 = vmax.f32 %v1182, 0.0
        %v1191 = vpack.c.bf16 %v1184, %v1183
        %v1192 = vpack.c.bf16 %v1186, %v1185
        %v1193 = vpack.c.bf16 %v1188, %v1187
        %v1194 = vpack.c.bf16 %v1190, %v1189
        %v1195 = vld [vmem:[#allocation8] sm:$0xff]
        %v1196 = vld [vmem:[#allocation8 + $0x8] sm:$0xf]
        %v1197 = vld [vmem:[#allocation8 + $0xc] sm:$0xff]
        %v1198 = vld [vmem:[#allocation8 + $0x14] sm:$0xf]
        %v1199 = vld [vmem:[#allocation8 + $0x18] sm:$0xff]
        %v1200 = vld [vmem:[#allocation8 + $0x20] sm:$0xf]
        %v1201 = vld [vmem:[#allocation8 + $0x24] sm:$0xff]
        %v1202 = vld [vmem:[#allocation8 + $0x2c] sm:$0xf]
        %v1203 = vld [vmem:[#allocation8 + $0x30] sm:$0xff]
        %v1204 = vld [vmem:[#allocation8 + $0x38] sm:$0xf]
        %v1205 = vld [vmem:[#allocation8 + $0x3c] sm:$0xff]
        %v1206 = vld [vmem:[#allocation8 + $0x44] sm:$0xf]
        %v1207 = vld [vmem:[#allocation8 + $0x48] sm:$0xff]
        %v1208 = vld [vmem:[#allocation8 + $0x50] sm:$0xf]
        %v1209 = vld [vmem:[#allocation8 + $0x54] sm:$0xff]
        %v1210 = vld [vmem:[#allocation8 + $0x5c] sm:$0xf]
        %v1211 = vld [vmem:[#allocation8 + $0x60] sm:$0xff]
        %v1212 = vld [vmem:[#allocation8 + $0x68] sm:$0xf]
        %v1213 = vld [vmem:[#allocation8 + $0x6c] sm:$0xff]
        %v1214 = vld [vmem:[#allocation8 + $0x74] sm:$0xf]
        %v1215 = vld [vmem:[#allocation8 + $0x78] sm:$0xff]
        %v1216 = vld [vmem:[#allocation8 + $0x80] sm:$0xf]
        %v1217 = vld [vmem:[#allocation8 + $0x84] sm:$0xff]
        %v1218 = vld [vmem:[#allocation8 + $0x8c] sm:$0xf]
        %v1219 = vld [vmem:[#allocation8 + $0x90] sm:$0xff]
        %v1220 = vld [vmem:[#allocation8 + $0x98] sm:$0xf]
        %v1221 = vld [vmem:[#allocation8 + $0x9c] sm:$0xff]
        %v1222 = vld [vmem:[#allocation8 + $0xa4] sm:$0xf]
        %v1223 = vld [vmem:[#allocation8 + $0xa8] sm:$0xff]
        %v1224 = vld [vmem:[#allocation8 + $0xb0] sm:$0xf]
        %v1225 = vld [vmem:[#allocation8 + $0xb4] sm:$0xff]
        %v1226 = vld [vmem:[#allocation8 + $0xbc] sm:$0xf]
        %v1259 = vunpack.c.l.b16 %v1195
        %v1260 = vunpack.c.h.b16 %v1195
        %v1261 = vunpack.c.l.b16 %v1196
        %v1262 = vunpack.c.l.b16 %v1197
        %v1263 = vunpack.c.h.b16 %v1197
        %v1264 = vunpack.c.l.b16 %v1198
        %v1265 = vunpack.c.l.b16 %v1199
        %v1266 = vunpack.c.h.b16 %v1199
        %v1267 = vunpack.c.l.b16 %v1200
        %v1268 = vunpack.c.l.b16 %v1201
        %v1269 = vunpack.c.h.b16 %v1201
        %v1270 = vunpack.c.l.b16 %v1202
        %v1271 = vunpack.c.l.b16 %v1203
        %v1272 = vunpack.c.h.b16 %v1203
        %v1273 = vunpack.c.l.b16 %v1204
        %v1274 = vunpack.c.l.b16 %v1205
        %v1275 = vunpack.c.h.b16 %v1205
        %v1276 = vunpack.c.l.b16 %v1206
        %v1277 = vunpack.c.l.b16 %v1207
        %v1278 = vunpack.c.h.b16 %v1207
        %v1279 = vunpack.c.l.b16 %v1208
        %v1280 = vunpack.c.l.b16 %v1209
        %v1281 = vunpack.c.h.b16 %v1209
        %v1282 = vunpack.c.l.b16 %v1210
        %v1283 = vunpack.c.l.b16 %v1211
        %v1284 = vunpack.c.h.b16 %v1211
        %v1285 = vunpack.c.l.b16 %v1212
        %v1286 = vunpack.c.l.b16 %v1213
        %v1287 = vunpack.c.h.b16 %v1213
        %v1288 = vunpack.c.l.b16 %v1214
        %v1289 = vunpack.c.l.b16 %v1215
        %v1290 = vunpack.c.h.b16 %v1215
        %v1291 = vunpack.c.l.b16 %v1216
        %v1292 = vunpack.c.l.b16 %v1217
        %v1293 = vunpack.c.h.b16 %v1217
        %v1294 = vunpack.c.l.b16 %v1218
        %v1295 = vunpack.c.l.b16 %v1219
        %v1296 = vunpack.c.h.b16 %v1219
        %v1297 = vunpack.c.l.b16 %v1220
        %v1298 = vunpack.c.l.b16 %v1221
        %v1299 = vunpack.c.h.b16 %v1221
        %v1300 = vunpack.c.l.b16 %v1222
        %v1301 = vunpack.c.l.b16 %v1223
        %v1302 = vunpack.c.h.b16 %v1223
        %v1303 = vunpack.c.l.b16 %v1224
        %v1304 = vunpack.c.l.b16 %v1225
        %v1305 = vunpack.c.h.b16 %v1225
        %v1306 = vunpack.c.l.b16 %v1226
        %v1307 = vpack.c.b16 %v1262, %v1259
        %v1308 = vpack.c.b16 %v1263, %v1260
        %v1309 = vpack.c.b16 %v1264, %v1261
        %v1310 = vpack.c.b16 %v1268, %v1265
        %v1311 = vpack.c.b16 %v1269, %v1266
        %v1312 = vpack.c.b16 %v1270, %v1267
        %v1313 = vpack.c.b16 %v1274, %v1271
        %v1314 = vpack.c.b16 %v1275, %v1272
        %v1315 = vpack.c.b16 %v1276, %v1273
        %v1316 = vpack.c.b16 %v1280, %v1277
        %v1317 = vpack.c.b16 %v1281, %v1278
        %v1318 = vpack.c.b16 %v1282, %v1279
        %v1319 = vpack.c.b16 %v1286, %v1283
        %v1320 = vpack.c.b16 %v1287, %v1284
        %v1321 = vpack.c.b16 %v1288, %v1285
        %v1322 = vpack.c.b16 %v1292, %v1289
        %v1323 = vpack.c.b16 %v1293, %v1290
        %v1324 = vpack.c.b16 %v1294, %v1291
        %v1325 = vpack.c.b16 %v1298, %v1295
        %v1326 = vpack.c.b16 %v1299, %v1296
        %v1327 = vpack.c.b16 %v1300, %v1297
        %v1328 = vpack.c.b16 %v1304, %v1301
        %v1329 = vpack.c.b16 %v1305, %v1302
        %v1330 = vpack.c.b16 %v1306, %v1303
        %1355 = vmatprep.subr.bf16.mxu0 %v1329
        %1356 = vmatpush1.bf16.msra.mxu0 %v1328
        %1357 = vmatprep.subr.bf16.mxu0 %v1326
        %1358 = vmatpush1.bf16.msra.mxu0 %v1325
        %1359 = vmatprep.subr.bf16.mxu0 %v1323
        %1360 = vmatpush1.bf16.msra.mxu0 %v1322
        %1361 = vmatprep.subr.bf16.mxu0 %v1320
        %1362 = vmatpush1.bf16.msra.mxu0 %v1319
        %1363 = vmatprep.subr.bf16.mxu0 %v1317
        %1364 = vmatpush1.bf16.msra.mxu0 %v1316
        %1365 = vmatprep.subr.bf16.mxu0 %v1314
        %1366 = vmatpush1.bf16.msra.mxu0 %v1313
        %1367 = vmatprep.subr.bf16.mxu0 %v1311
        %1368 = vmatpush1.bf16.msra.mxu0 %v1310
        %1369 = vmatprep.subr.bf16.mxu0 %v1308
        %1370 = vmatpush1.bf16.msra.mxu0 %v1307
        %1371 = vmatprep.subr.bf16.mxu0 0
        %1372 = vmatpush2.bf16.msra.mxu0 0
        %1373 = vmatprep.subr.bf16.mxu0 0
        %1374 = vmatpush2.bf16.msra.mxu0 0
        %1375 = vmatprep.subr.bf16.mxu0 0
        %1376 = vmatpush2.bf16.msra.mxu0 0
        %1377 = vmatprep.subr.bf16.mxu0 0
        %1378 = vmatpush2.bf16.msra.mxu0 0
        %1379 = vmatprep.subr.bf16.mxu0 0
        %1380 = vmatpush2.bf16.msra.mxu0 0
        %1381 = vmatprep.subr.bf16.mxu0 0
        %1382 = vmatpush2.bf16.msra.mxu0 0
        %1383 = vmatprep.subr.bf16.mxu0 0
        %1384 = vmatpush2.bf16.msra.mxu0 0
        %1385 = vmatprep.subr.bf16.mxu0 0
        %1386 = vmatpush2.bf16.msra.mxu0 0
        %1387 = vmatprep.mubr.bf16.mxu0 0
        %1388 = vmatmul.mubr.bf16.gmra.mxu0 %v1191
        %v1389 = vpop.f32.mrf.mxu0
        %v1390 = vadd.f32 0.0, %v1389
        %v1391 = vpop.f32.mrf.mxu0
        %v1392 = vadd.f32 0.0, %v1391
        %v1393 = vpop.f32.mrf.mxu0
        %v1394 = vadd.f32 0.0, %v1393
        %v1395 = vpop.f32.mrf.mxu0
        %v1396 = vadd.f32 0.0, %v1395
        %1397 = vmatprep.mubr.bf16.mxu0 0
        %1398 = vmatmul.mubr.bf16.gmra.mxu0 %v1192
        %v1399 = vpop.f32.mrf.mxu0
        %v1400 = vadd.f32 0.0, %v1399
        %v1401 = vpop.f32.mrf.mxu0
        %v1402 = vadd.f32 0.0, %v1401
        %v1403 = vpop.f32.mrf.mxu0
        %v1404 = vadd.f32 0.0, %v1403
        %v1405 = vpop.f32.mrf.mxu0
        %v1406 = vadd.f32 0.0, %v1405
        %1407 = vmatprep.mubr.bf16.mxu0 0
        %1408 = vmatmul.mubr.bf16.gmra.mxu0 %v1193
        %v1409 = vpop.f32.mrf.mxu0
        %v1410 = vadd.f32 0.0, %v1409
        %v1411 = vpop.f32.mrf.mxu0
        %v1412 = vadd.f32 0.0, %v1411
        %v1413 = vpop.f32.mrf.mxu0
        %v1414 = vadd.f32 0.0, %v1413
        %v1415 = vpop.f32.mrf.mxu0
        %v1416 = vadd.f32 0.0, %v1415
        %1417 = vmatprep.mubr.bf16.mxu0 0
        %1418 = vmatmul.mubr.bf16.gmra.mxu0 %v1194
        %v1419 = vpop.f32.mrf.mxu0
        %v1420 = vadd.f32 0.0, %v1419
        %v1421 = vpop.f32.mrf.mxu0
        %v1422 = vadd.f32 0.0, %v1421
        %v1423 = vpop.f32.mrf.mxu0
        %v1424 = vadd.f32 0.0, %v1423
        %v1425 = vpop.f32.mrf.mxu0
        %v1426 = vadd.f32 0.0, %v1425
        %1427 = vdwg.mxu0
        %1428 = vmatprep.subr.bf16.mxu0 0
        %1429 = vmatpush1.bf16.msra.mxu0 %v1330
        %1430 = vmatprep.subr.bf16.mxu0 0
        %1431 = vmatpush1.bf16.msra.mxu0 %v1327
        %1432 = vmatprep.subr.bf16.mxu0 0
        %1433 = vmatpush1.bf16.msra.mxu0 %v1324
        %1434 = vmatprep.subr.bf16.mxu0 0
        %1435 = vmatpush1.bf16.msra.mxu0 %v1321
        %1436 = vmatprep.subr.bf16.mxu0 0
        %1437 = vmatpush1.bf16.msra.mxu0 %v1318
        %1438 = vmatprep.subr.bf16.mxu0 0
        %1439 = vmatpush1.bf16.msra.mxu0 %v1315
        %1440 = vmatprep.subr.bf16.mxu0 0
        %1441 = vmatpush1.bf16.msra.mxu0 %v1312
        %1442 = vmatprep.subr.bf16.mxu0 0
        %1443 = vmatpush1.bf16.msra.mxu0 %v1309
        %1444 = vmatprep.subr.bf16.mxu0 0
        %1445 = vmatpush2.bf16.msra.mxu0 0
        %1446 = vmatprep.subr.bf16.mxu0 0
        %1447 = vmatpush2.bf16.msra.mxu0 0
        %1448 = vmatprep.subr.bf16.mxu0 0
        %1449 = vmatpush2.bf16.msra.mxu0 0
        %1450 = vmatprep.subr.bf16.mxu0 0
        %1451 = vmatpush2.bf16.msra.mxu0 0
        %1452 = vmatprep.subr.bf16.mxu0 0
        %1453 = vmatpush2.bf16.msra.mxu0 0
        %1454 = vmatprep.subr.bf16.mxu0 0
        %1455 = vmatpush2.bf16.msra.mxu0 0
        %1456 = vmatprep.subr.bf16.mxu0 0
        %1457 = vmatpush2.bf16.msra.mxu0 0
        %1458 = vmatprep.subr.bf16.mxu0 0
        %1459 = vmatpush2.bf16.msra.mxu0 0
        %1460 = vmatprep.mubr.bf16.mxu0 0
        %1461 = vmatmul.mubr.bf16.gmra.mxu0 %v1191
        %v1462 = vpop.f32.mrf.mxu0
        %v1463 = vadd.f32 0.0, %v1462
        %v1464 = vpop.f32.mrf.mxu0
        %v1465 = vpop.f32.mrf.mxu0
        %v1466 = vadd.f32 0.0, %v1465
        %v1467 = vpop.f32.mrf.mxu0
        %1468 = vmatprep.mubr.bf16.mxu0 0
        %1469 = vmatmul.mubr.bf16.gmra.mxu0 %v1192
        %v1470 = vpop.f32.mrf.mxu0
        %v1471 = vadd.f32 0.0, %v1470
        %v1472 = vpop.f32.mrf.mxu0
        %v1473 = vpop.f32.mrf.mxu0
        %v1474 = vadd.f32 0.0, %v1473
        %v1475 = vpop.f32.mrf.mxu0
        %1476 = vmatprep.mubr.bf16.mxu0 0
        %1477 = vmatmul.mubr.bf16.gmra.mxu0 %v1193
        %v1478 = vpop.f32.mrf.mxu0
        %v1479 = vadd.f32 0.0, %v1478
        %v1480 = vpop.f32.mrf.mxu0
        %v1481 = vpop.f32.mrf.mxu0
        %v1482 = vadd.f32 0.0, %v1481
        %v1483 = vpop.f32.mrf.mxu0
        %1484 = vmatprep.mubr.bf16.mxu0 0
        %1485 = vmatmul.mubr.bf16.gmra.mxu0 %v1194
        %v1486 = vpop.f32.mrf.mxu0
        %v1487 = vadd.f32 0.0, %v1486
        %v1488 = vpop.f32.mrf.mxu0
        %v1489 = vpop.f32.mrf.mxu0
        %v1490 = vadd.f32 0.0, %v1489
        %v1491 = vpop.f32.mrf.mxu0
        %1492 = vdwg.mxu0
        %v1493 = vrot.slane %v1390, 4
        %v1494 = vrot.slane %v1394, 4
        %v1495 = vrot.slane %v1400, 4
        %v1496 = vrot.slane %v1404, 4
        %v1497 = vrot.slane %v1410, 4
        %v1498 = vrot.slane %v1414, 4
        %v1499 = vrot.slane %v1420, 4
        %v1500 = vrot.slane %v1424, 4
        %vm1501 = vcmp.lt.s32.totalorder %v341, 4
        %v1502 = vsel %vm1501, %v1499, %v1500
        %v1503 = vsel %vm1501, %v1498, %v1499
        %v1504 = vsel %vm1501, %v1497, %v1498
        %v1505 = vsel %vm1501, %v1496, %v1497
        %v1506 = vsel %vm1501, %v1495, %v1496
        %v1507 = vsel %vm1501, %v1494, %v1495
        %v1508 = vsel %vm1501, %v1493, %v1494
        %v1509 = vsel %vm1501, %v1500, %v1493
        %v1510 = vsel %vm347, %v1509, 0.0
        %v1511 = vsel %vm348, %v1508, 0.0
        %v1512 = vsel %vm347, %v1507, 0.0
        %v1513 = vsel %vm348, %v1506, 0.0
        %v1514 = vsel %vm347, %v1505, 0.0
        %v1515 = vsel %vm348, %v1504, 0.0
        %v1516 = vsel %vm347, %v1503, 0.0
        %v1517 = vsel %vm348, %v1502, 0.0
        %v1518 = vadd.f32 %v1463, %v1510
        %v1519 = vadd.f32 %v1466, %v1511
        %v1520 = vadd.f32 %v1471, %v1512
        %v1521 = vadd.f32 %v1474, %v1513
        %v1522 = vadd.f32 %v1479, %v1514
        %v1523 = vadd.f32 %v1482, %v1515
        %v1524 = vadd.f32 %v1487, %v1516
        %v1525 = vadd.f32 %v1490, %v1517
        %v1526 = vrot.slane %v1392, 6
        %v1527 = vrot.slane %v1396, 6
        %v1528 = vrot.slane %v1402, 6
        %v1529 = vrot.slane %v1406, 6
        %v1530 = vrot.slane %v1412, 6
        %v1531 = vrot.slane %v1416, 6
        %v1532 = vrot.slane %v1422, 6
        %v1533 = vrot.slane %v1426, 6
        %v1534 = vsel %vm699, %v1532, %v1533
        %v1535 = vsel %vm699, %v1531, %v1532
        %v1536 = vsel %vm699, %v1530, %v1531
        %v1537 = vsel %vm699, %v1529, %v1530
        %v1538 = vsel %vm699, %v1528, %v1529
        %v1539 = vsel %vm699, %v1527, %v1528
        %v1540 = vsel %vm699, %v1526, %v1527
        %v1541 = vsel %vm699, %v1533, %v1526
        %v1542 = vsel %vm345, %v1541, 0.0
        %v1543 = vsel %vm346, %v1540, 0.0
        %v1544 = vsel %vm345, %v1539, 0.0
        %v1545 = vsel %vm346, %v1538, 0.0
        %v1546 = vsel %vm345, %v1537, 0.0
        %v1547 = vsel %vm346, %v1536, 0.0
        %v1548 = vsel %vm345, %v1535, 0.0
        %v1549 = vsel %vm346, %v1534, 0.0
        %v1550 = vadd.f32 %v1518, %v1542
        %v1551 = vadd.f32 %v1519, %v1543
        %v1552 = vadd.f32 %v1520, %v1544
        %v1553 = vadd.f32 %v1521, %v1545
        %v1554 = vadd.f32 %v1522, %v1546
        %v1555 = vadd.f32 %v1523, %v1547
        %v1556 = vadd.f32 %v1524, %v1548
        %v1557 = vadd.f32 %v1525, %v1549
        %v1558 = vlaneseq
        %v1559 = vshrl.u32 %v1558, 7
        %v1560 = vsub.s32 3, %v1559
        %v1561 = vrot.slane %v331, %v1560
        %v1562 = vadd.f32 %v1550, %v1561
        %v1563 = vadd.f32 %v1551, %v1561
        %v1564 = vadd.f32 %v1552, %v1561
        %v1565 = vadd.f32 %v1553, %v1561
        %v1566 = vadd.f32 %v1554, %v1561
        %v1567 = vadd.f32 %v1555, %v1561
        %v1568 = vadd.f32 %v1556, %v1561
        %v1569 = vadd.f32 %v1557, %v1561
        %v1570 = vmax.f32 %v1562, 0.0
        %v1571 = vmax.f32 %v1563, 0.0
        %v1572 = vmax.f32 %v1564, 0.0
        %v1573 = vmax.f32 %v1565, 0.0
        %v1574 = vmax.f32 %v1566, 0.0
        %v1575 = vmax.f32 %v1567, 0.0
        %v1576 = vmax.f32 %v1568, 0.0
        %v1577 = vmax.f32 %v1569, 0.0
        %v1578 = vpack.c.bf16 %v1571, %v1570
        %v1579 = vpack.c.bf16 %v1573, %v1572
        %v1580 = vpack.c.bf16 %v1575, %v1574
        %v1581 = vpack.c.bf16 %v1577, %v1576
        %v1582 = vld [vmem:[#allocation10] sm:$0xff]
        %v1583 = vld [vmem:[#allocation10 + $0x8] sm:$0xf]
        %v1584 = vld [vmem:[#allocation10 + $0xc] sm:$0xff]
        %v1585 = vld [vmem:[#allocation10 + $0x14] sm:$0xf]
        %v1586 = vld [vmem:[#allocation10 + $0x18] sm:$0xff]
        %v1587 = vld [vmem:[#allocation10 + $0x20] sm:$0xf]
        %v1588 = vld [vmem:[#allocation10 + $0x24] sm:$0xff]
        %v1589 = vld [vmem:[#allocation10 + $0x2c] sm:$0xf]
        %v1590 = vld [vmem:[#allocation10 + $0x30] sm:$0xff]
        %v1591 = vld [vmem:[#allocation10 + $0x38] sm:$0xf]
        %v1592 = vld [vmem:[#allocation10 + $0x3c] sm:$0xff]
        %v1593 = vld [vmem:[#allocation10 + $0x44] sm:$0xf]
        %v1594 = vld [vmem:[#allocation10 + $0x48] sm:$0xff]
        %v1595 = vld [vmem:[#allocation10 + $0x50] sm:$0xf]
        %v1596 = vld [vmem:[#allocation10 + $0x54] sm:$0xff]
        %v1597 = vld [vmem:[#allocation10 + $0x5c] sm:$0xf]
        %v1598 = vld [vmem:[#allocation10 + $0x60] sm:$0xff]
        %v1599 = vld [vmem:[#allocation10 + $0x68] sm:$0xf]
        %v1600 = vld [vmem:[#allocation10 + $0x6c] sm:$0xff]
        %v1601 = vld [vmem:[#allocation10 + $0x74] sm:$0xf]
        %v1602 = vld [vmem:[#allocation10 + $0x78] sm:$0xff]
        %v1603 = vld [vmem:[#allocation10 + $0x80] sm:$0xf]
        %v1604 = vld [vmem:[#allocation10 + $0x84] sm:$0xff]
        %v1605 = vld [vmem:[#allocation10 + $0x8c] sm:$0xf]
        %v1606 = vld [vmem:[#allocation10 + $0x90] sm:$0xff]
        %v1607 = vld [vmem:[#allocation10 + $0x98] sm:$0xf]
        %v1608 = vld [vmem:[#allocation10 + $0x9c] sm:$0xff]
        %v1609 = vld [vmem:[#allocation10 + $0xa4] sm:$0xf]
        %v1610 = vld [vmem:[#allocation10 + $0xa8] sm:$0xff]
        %v1611 = vld [vmem:[#allocation10 + $0xb0] sm:$0xf]
        %v1612 = vld [vmem:[#allocation10 + $0xb4] sm:$0xff]
        %v1613 = vld [vmem:[#allocation10 + $0xbc] sm:$0xf]
        %v1646 = vunpack.c.l.b16 %v1582
        %v1647 = vunpack.c.h.b16 %v1582
        %v1648 = vunpack.c.l.b16 %v1583
        %v1649 = vunpack.c.l.b16 %v1584
        %v1650 = vunpack.c.h.b16 %v1584
        %v1651 = vunpack.c.l.b16 %v1585
        %v1652 = vunpack.c.l.b16 %v1586
        %v1653 = vunpack.c.h.b16 %v1586
        %v1654 = vunpack.c.l.b16 %v1587
        %v1655 = vunpack.c.l.b16 %v1588
        %v1656 = vunpack.c.h.b16 %v1588
        %v1657 = vunpack.c.l.b16 %v1589
        %v1658 = vunpack.c.l.b16 %v1590
        %v1659 = vunpack.c.h.b16 %v1590
        %v1660 = vunpack.c.l.b16 %v1591
        %v1661 = vunpack.c.l.b16 %v1592
        %v1662 = vunpack.c.h.b16 %v1592
        %v1663 = vunpack.c.l.b16 %v1593
        %v1664 = vunpack.c.l.b16 %v1594
        %v1665 = vunpack.c.h.b16 %v1594
        %v1666 = vunpack.c.l.b16 %v1595
        %v1667 = vunpack.c.l.b16 %v1596
        %v1668 = vunpack.c.h.b16 %v1596
        %v1669 = vunpack.c.l.b16 %v1597
        %v1670 = vunpack.c.l.b16 %v1598
        %v1671 = vunpack.c.h.b16 %v1598
        %v1672 = vunpack.c.l.b16 %v1599
        %v1673 = vunpack.c.l.b16 %v1600
        %v1674 = vunpack.c.h.b16 %v1600
        %v1675 = vunpack.c.l.b16 %v1601
        %v1676 = vunpack.c.l.b16 %v1602
        %v1677 = vunpack.c.h.b16 %v1602
        %v1678 = vunpack.c.l.b16 %v1603
        %v1679 = vunpack.c.l.b16 %v1604
        %v1680 = vunpack.c.h.b16 %v1604
        %v1681 = vunpack.c.l.b16 %v1605
        %v1682 = vunpack.c.l.b16 %v1606
        %v1683 = vunpack.c.h.b16 %v1606
        %v1684 = vunpack.c.l.b16 %v1607
        %v1685 = vunpack.c.l.b16 %v1608
        %v1686 = vunpack.c.h.b16 %v1608
        %v1687 = vunpack.c.l.b16 %v1609
        %v1688 = vunpack.c.l.b16 %v1610
        %v1689 = vunpack.c.h.b16 %v1610
        %v1690 = vunpack.c.l.b16 %v1611
        %v1691 = vunpack.c.l.b16 %v1612
        %v1692 = vunpack.c.h.b16 %v1612
        %v1693 = vunpack.c.l.b16 %v1613
        %v1694 = vpack.c.b16 %v1649, %v1646
        %v1695 = vpack.c.b16 %v1650, %v1647
        %v1696 = vpack.c.b16 %v1651, %v1648
        %v1697 = vpack.c.b16 %v1655, %v1652
        %v1698 = vpack.c.b16 %v1656, %v1653
        %v1699 = vpack.c.b16 %v1657, %v1654
        %v1700 = vpack.c.b16 %v1661, %v1658
        %v1701 = vpack.c.b16 %v1662, %v1659
        %v1702 = vpack.c.b16 %v1663, %v1660
        %v1703 = vpack.c.b16 %v1667, %v1664
        %v1704 = vpack.c.b16 %v1668, %v1665
        %v1705 = vpack.c.b16 %v1669, %v1666
        %v1706 = vpack.c.b16 %v1673, %v1670
        %v1707 = vpack.c.b16 %v1674, %v1671
        %v1708 = vpack.c.b16 %v1675, %v1672
        %v1709 = vpack.c.b16 %v1679, %v1676
        %v1710 = vpack.c.b16 %v1680, %v1677
        %v1711 = vpack.c.b16 %v1681, %v1678
        %v1712 = vpack.c.b16 %v1685, %v1682
        %v1713 = vpack.c.b16 %v1686, %v1683
        %v1714 = vpack.c.b16 %v1687, %v1684
        %v1715 = vpack.c.b16 %v1691, %v1688
        %v1716 = vpack.c.b16 %v1692, %v1689
        %v1717 = vpack.c.b16 %v1693, %v1690
        %1742 = vmatprep.subr.bf16.mxu0 %v1716
        %1743 = vmatpush1.bf16.msra.mxu0 %v1715
        %1744 = vmatprep.subr.bf16.mxu0 %v1713
        %1745 = vmatpush1.bf16.msra.mxu0 %v1712
        %1746 = vmatprep.subr.bf16.mxu0 %v1710
        %1747 = vmatpush1.bf16.msra.mxu0 %v1709
        %1748 = vmatprep.subr.bf16.mxu0 %v1707
        %1749 = vmatpush1.bf16.msra.mxu0 %v1706
        %1750 = vmatprep.subr.bf16.mxu0 %v1704
        %1751 = vmatpush1.bf16.msra.mxu0 %v1703
        %1752 = vmatprep.subr.bf16.mxu0 %v1701
        %1753 = vmatpush1.bf16.msra.mxu0 %v1700
        %1754 = vmatprep.subr.bf16.mxu0 %v1698
        %1755 = vmatpush1.bf16.msra.mxu0 %v1697
        %1756 = vmatprep.subr.bf16.mxu0 %v1695
        %1757 = vmatpush1.bf16.msra.mxu0 %v1694
        %1758 = vmatprep.subr.bf16.mxu0 0
        %1759 = vmatpush2.bf16.msra.mxu0 0
        %1760 = vmatprep.subr.bf16.mxu0 0
        %1761 = vmatpush2.bf16.msra.mxu0 0
        %1762 = vmatprep.subr.bf16.mxu0 0
        %1763 = vmatpush2.bf16.msra.mxu0 0
        %1764 = vmatprep.subr.bf16.mxu0 0
        %1765 = vmatpush2.bf16.msra.mxu0 0
        %1766 = vmatprep.subr.bf16.mxu0 0
        %1767 = vmatpush2.bf16.msra.mxu0 0
        %1768 = vmatprep.subr.bf16.mxu0 0
        %1769 = vmatpush2.bf16.msra.mxu0 0
        %1770 = vmatprep.subr.bf16.mxu0 0
        %1771 = vmatpush2.bf16.msra.mxu0 0
        %1772 = vmatprep.subr.bf16.mxu0 0
        %1773 = vmatpush2.bf16.msra.mxu0 0
        %1774 = vmatprep.mubr.bf16.mxu0 0
        %1775 = vmatmul.mubr.bf16.gmra.mxu0 %v1578
        %v1776 = vpop.f32.mrf.mxu0
        %v1777 = vadd.f32 0.0, %v1776
        %v1778 = vpop.f32.mrf.mxu0
        %v1779 = vadd.f32 0.0, %v1778
        %v1780 = vpop.f32.mrf.mxu0
        %v1781 = vadd.f32 0.0, %v1780
        %v1782 = vpop.f32.mrf.mxu0
        %v1783 = vadd.f32 0.0, %v1782
        %1784 = vmatprep.mubr.bf16.mxu0 0
        %1785 = vmatmul.mubr.bf16.gmra.mxu0 %v1579
        %v1786 = vpop.f32.mrf.mxu0
        %v1787 = vadd.f32 0.0, %v1786
        %v1788 = vpop.f32.mrf.mxu0
        %v1789 = vadd.f32 0.0, %v1788
        %v1790 = vpop.f32.mrf.mxu0
        %v1791 = vadd.f32 0.0, %v1790
        %v1792 = vpop.f32.mrf.mxu0
        %v1793 = vadd.f32 0.0, %v1792
        %1794 = vmatprep.mubr.bf16.mxu0 0
        %1795 = vmatmul.mubr.bf16.gmra.mxu0 %v1580
        %v1796 = vpop.f32.mrf.mxu0
        %v1797 = vadd.f32 0.0, %v1796
        %v1798 = vpop.f32.mrf.mxu0
        %v1799 = vadd.f32 0.0, %v1798
        %v1800 = vpop.f32.mrf.mxu0
        %v1801 = vadd.f32 0.0, %v1800
        %v1802 = vpop.f32.mrf.mxu0
        %v1803 = vadd.f32 0.0, %v1802
        %1804 = vmatprep.mubr.bf16.mxu0 0
        %1805 = vmatmul.mubr.bf16.gmra.mxu0 %v1581
        %v1806 = vpop.f32.mrf.mxu0
        %v1807 = vadd.f32 0.0, %v1806
        %v1808 = vpop.f32.mrf.mxu0
        %v1809 = vadd.f32 0.0, %v1808
        %v1810 = vpop.f32.mrf.mxu0
        %v1811 = vadd.f32 0.0, %v1810
        %v1812 = vpop.f32.mrf.mxu0
        %v1813 = vadd.f32 0.0, %v1812
        %1814 = vdwg.mxu0
        %1815 = vmatprep.subr.bf16.mxu0 0
        %1816 = vmatpush1.bf16.msra.mxu0 %v1717
        %1817 = vmatprep.subr.bf16.mxu0 0
        %1818 = vmatpush1.bf16.msra.mxu0 %v1714
        %1819 = vmatprep.subr.bf16.mxu0 0
        %1820 = vmatpush1.bf16.msra.mxu0 %v1711
        %1821 = vmatprep.subr.bf16.mxu0 0
        %1822 = vmatpush1.bf16.msra.mxu0 %v1708
        %1823 = vmatprep.subr.bf16.mxu0 0
        %1824 = vmatpush1.bf16.msra.mxu0 %v1705
        %1825 = vmatprep.subr.bf16.mxu0 0
        %1826 = vmatpush1.bf16.msra.mxu0 %v1702
        %1827 = vmatprep.subr.bf16.mxu0 0
        %1828 = vmatpush1.bf16.msra.mxu0 %v1699
        %1829 = vmatprep.subr.bf16.mxu0 0
        %1830 = vmatpush1.bf16.msra.mxu0 %v1696
        %1831 = vmatprep.subr.bf16.mxu0 0
        %1832 = vmatpush2.bf16.msra.mxu0 0
        %1833 = vmatprep.subr.bf16.mxu0 0
        %1834 = vmatpush2.bf16.msra.mxu0 0
        %1835 = vmatprep.subr.bf16.mxu0 0
        %1836 = vmatpush2.bf16.msra.mxu0 0
        %1837 = vmatprep.subr.bf16.mxu0 0
        %1838 = vmatpush2.bf16.msra.mxu0 0
        %1839 = vmatprep.subr.bf16.mxu0 0
        %1840 = vmatpush2.bf16.msra.mxu0 0
        %1841 = vmatprep.subr.bf16.mxu0 0
        %1842 = vmatpush2.bf16.msra.mxu0 0
        %1843 = vmatprep.subr.bf16.mxu0 0
        %1844 = vmatpush2.bf16.msra.mxu0 0
        %1845 = vmatprep.subr.bf16.mxu0 0
        %1846 = vmatpush2.bf16.msra.mxu0 0
        %1847 = vmatprep.mubr.bf16.mxu0 0
        %1848 = vmatmul.mubr.bf16.gmra.mxu0 %v1578
        %v1849 = vpop.f32.mrf.mxu0
        %v1850 = vpop.f32.mrf.mxu0
        %v1851 = vpop.f32.mrf.mxu0
        %v1852 = vadd.f32 0.0, %v1851
        %v1853 = vpop.f32.mrf.mxu0
        %1854 = vmatprep.mubr.bf16.mxu0 0
        %1855 = vmatmul.mubr.bf16.gmra.mxu0 %v1579
        %v1856 = vpop.f32.mrf.mxu0
        %v1857 = vpop.f32.mrf.mxu0
        %v1858 = vpop.f32.mrf.mxu0
        %v1859 = vadd.f32 0.0, %v1858
        %v1860 = vpop.f32.mrf.mxu0
        %1861 = vmatprep.mubr.bf16.mxu0 0
        %1862 = vmatmul.mubr.bf16.gmra.mxu0 %v1580
        %v1863 = vpop.f32.mrf.mxu0
        %v1864 = vpop.f32.mrf.mxu0
        %v1865 = vpop.f32.mrf.mxu0
        %v1866 = vadd.f32 0.0, %v1865
        %v1867 = vpop.f32.mrf.mxu0
        %1868 = vmatprep.mubr.bf16.mxu0 0
        %1869 = vmatmul.mubr.bf16.gmra.mxu0 %v1581
        %v1870 = vpop.f32.mrf.mxu0
        %v1871 = vpop.f32.mrf.mxu0
        %v1872 = vpop.f32.mrf.mxu0
        %v1873 = vadd.f32 0.0, %v1872
        %v1874 = vpop.f32.mrf.mxu0
        %1875 = vdwg.mxu0
        %v1876 = vrot.slane %v1777, 4
        %v1877 = vrot.slane %v1781, 4
        %v1878 = vrot.slane %v1787, 4
        %v1879 = vrot.slane %v1791, 4
        %v1880 = vrot.slane %v1797, 4
        %v1881 = vrot.slane %v1801, 4
        %v1882 = vrot.slane %v1807, 4
        %v1883 = vrot.slane %v1811, 4
        %v1884 = vsel %vm1501, %v1882, %v1883
        %v1885 = vsel %vm1501, %v1880, %v1881
        %v1886 = vsel %vm1501, %v1878, %v1879
        %v1887 = vsel %vm1501, %v1876, %v1877
        %v1888 = vsel %vm348, %v1887, 0.0
        %v1889 = vsel %vm348, %v1886, 0.0
        %v1890 = vsel %vm348, %v1885, 0.0
        %v1891 = vsel %vm348, %v1884, 0.0
        %v1892 = vadd.f32 %v1852, %v1888
        %v1893 = vadd.f32 %v1859, %v1889
        %v1894 = vadd.f32 %v1866, %v1890
        %v1895 = vadd.f32 %v1873, %v1891
        %v1896 = vrot.slane %v1779, 6
        %v1897 = vrot.slane %v1783, 6
        %v1898 = vrot.slane %v1789, 6
        %v1899 = vrot.slane %v1793, 6
        %v1900 = vrot.slane %v1799, 6
        %v1901 = vrot.slane %v1803, 6
        %v1902 = vrot.slane %v1809, 6
        %v1903 = vrot.slane %v1813, 6
        %v1904 = vsel %vm699, %v1902, %v1903
        %v1905 = vsel %vm699, %v1900, %v1901
        %v1906 = vsel %vm699, %v1898, %v1899
        %v1907 = vsel %vm699, %v1896, %v1897
        %v1908 = vsel %vm346, %v1907, 0.0
        %v1909 = vsel %vm346, %v1906, 0.0
        %v1910 = vsel %vm346, %v1905, 0.0
        %v1911 = vsel %vm346, %v1904, 0.0
        %v1912 = vadd.f32 %v1892, %v1908
        %v1913 = vadd.f32 %v1893, %v1909
        %v1914 = vadd.f32 %v1894, %v1910
        %v1915 = vadd.f32 %v1895, %v1911
        %v1916 = vlaneseq
        %v1917 = vshrl.u32 %v1916, 7
        %v1918 = vsub.s32 4, %v1917
        %v1919 = vrot.slane %v331, %v1918
        %v1920 = vadd.f32 %v1912, %v1919
        %v1921 = vadd.f32 %v1913, %v1919
        %v1922 = vadd.f32 %v1914, %v1919
        %v1923 = vadd.f32 %v1915, %v1919
        %v1924 = vmax.f32 %v1920, 0.0
        %v1925 = vmax.f32 %v1921, 0.0
        %v1926 = vmax.f32 %v1922, 0.0
        %v1927 = vmax.f32 %v1923, 0.0
        %v1928 = vadd.f32 %v1924, %v1184
        %v1929 = vadd.f32 %v1925, %v1186
        %v1930 = vadd.f32 %v1926, %v1188
        %v1931 = vadd.f32 %v1927, %v1190
        %v1932 = vmax.f32 %v1928, 0.0
        %v1933 = vmax.f32 %v1929, 0.0
        %v1934 = vmax.f32 %v1930, 0.0
        %v1935 = vmax.f32 %v1931, 0.0
        %1936 = vst [vmem:[%s328 - $0x7] sm:$0x80] %v1932
        %1937 = vst [vmem:[%s328 - $0x6] sm:$0x80] %v1933
        %1938 = vst [vmem:[%s328 - $0x5] sm:$0x80] %v1934
        %1939 = vst [vmem:[%s328 - $0x4] sm:$0x80] %v1935
        %s1940 = sand.u32 %s164, 1
        %s1941 = scalar_lea.sflag [#allocation4], %s1940
        %s1942 = sand.u32 %s164, 1
        %s1943 = smul.addr %s1942, 4
        %s1944 = scalar_lea.vmem [#allocation11], %s1943
        // Predicated region
        $region65: #{tpu_custom_call.1} parent=43 // pred_check
          %p1945 = pneg %p174
        $region66: #{tpu_custom_call.1} parent=43 // pred_check_branch
          %1947 = sbr.rel (%p1945) target = $region68
        $region67: #{tpu_custom_call.1} parent=43 // pred_region
          %s1949 = ssub.s32 64, 64
          %1950 = vsyncadd %s1941, %s1949
          %s1951 = smul.addr %s25, 64
          %s1952 = scalar_lea.hbm %s6, %s1951
          %s1954 = sshll.u32 %s1944, 4
          %s1955 = int_to_ptr.vmem [resolvable:$true] %s1954
          %1957 = dma.vmem_to_hbm [thread:$0]  %s1955, 64, %s1952, %s1941
        $region68: #{tpu_custom_call.1} parent=43 // pred_fallthru
          _
      $region44: #{tpu_custom_call.1} parent=5 // pred_fallthru
        _
      %p1958 = scmp.le.s32.totalorder 2, %s20
      // Predicated region
      $region69: #{tpu_custom_call.1} parent=5 // pred_check
        %p1959 = pneg %p1958
      $region70: #{tpu_custom_call.1} parent=5 // pred_check_branch
        %1961 = sbr.rel (%p1959) target = $region72
      $region71: #{tpu_custom_call.1} parent=5 // pred_region
        %s1962 = ssub.s32 %s20, 2
        // Predicated region
        $region73: #{tpu_custom_call.1} parent=71 // pred_check
          %p1963 = pneg %p180
        $region74: #{tpu_custom_call.1} parent=71 // pred_check_branch
          %1965 = sbr.rel (%p1963) target = $region76
        $region75: #{tpu_custom_call.1} parent=71 // pred_region
          %s1966 = sand.u32 %s165, 1
          %s1967 = scalar_lea.sflag [#allocation4], %s1966
          %s1968 = sand.u32 %s165, 1
          %s1969 = smul.addr %s1968, 4
          %s1970 = scalar_lea.vmem [#allocation11], %s1969
          %1971 = dma.done %s1967, 64
        $region76: #{tpu_custom_call.1} parent=71 // pred_fallthru
          _
      $region72: #{tpu_custom_call.1} parent=5 // pred_fallthru
        _
    $region6: #{tpu_custom_call.1} parent=1 // loop_footer
      %s24 = sadd.s32 1, %s20
    $region7: #{tpu_custom_call.1} parent=1 // loop_footer_branch
      %19 = sbr.rel target = $region3
    $region8: #{tpu_custom_call.1} parent=1 // loop_exit
      _
    %1972 = vsyncpa [#allocation3], 1
    %s1973 = scalar_lea.sflag [#allocation3], 1
    %1974 = vsyncpa %s1973, 1
    %1975 = vsyncpa [#allocation6], 1
    %1976 = vsyncpa [#allocation9], 1
    %1977 = vsyncpa [#allocation4], 1
    %s1978 = scalar_lea.sflag [#allocation4], 1
    %1979 = vsyncpa %s1978, 1

</llo_original>
